<compile_context>
chip_gen: v7x
topology: tpu7x:2x2x1
jax: 0.10.0
libtpu: 0.0.40
codegen_flags: <defaults>
</compile_context>

<pallas_src>
import jax
import jax.numpy as jnp
from jax.experimental import pallas as pl
from jax.experimental.pallas import tpu as pltpu

LANE = 128  # lane-dense width used for the whole hidden/fc pipeline


def _make_kernel(B_pad, TC, H, alpha):
    """TC = time steps per grid chunk; all refs are lane-padded to LANE."""

    def kernel(ctx_ref, sel_ref, obsm_ref, actm_ref, off_ref,
               wih_ref, whh_ref, brnn_ref, w1_ref, b1_ref, wf_ref, bf_ref,
               tb_ref, misc_ref, h_scr, head_scr):
        step = pl.program_id(0)

        @pl.when(step == 0)
        def _init():
            h_scr[...] = jnp.zeros_like(h_scr)
            head_scr[...] = jnp.zeros_like(head_scr)

        whh = whh_ref[...]                                  # (LANE, LANE) = padded W_hh^T

        # ---- hoisted input projection for this chunk: one matmul + fused RNN bias ----
        xproj = (jnp.dot(ctx_ref[...], wih_ref[...],
                         preferred_element_type=jnp.float32) + brnn_ref[...])

        # ---- serial tanh recurrence over the chunk; h kept in vregs (1 vreg/step) ----
        h = h_scr[...]                                      # (B_pad, LANE), pad lanes are 0
        hs = []
        for t in range(TC):
            h = jnp.tanh(xproj[t * B_pad:(t + 1) * B_pad, :]
                         + jnp.dot(h, whh, preferred_element_type=jnp.float32))
            hs.append(h)
        h_scr[...] = h                                      # carry hidden to the next chunk
        rnn = jnp.concatenate(hs, axis=0)                   # (TC*B_pad, LANE), no VMEM trip

        # ---- fc head for this chunk: relu -> fc1 -> relu -> fc (all lane-padded) ----
        r = jnp.maximum(rnn, 0.0)
        h1 = jnp.maximum(
            jnp.dot(r, w1_ref[...], preferred_element_type=jnp.float32) + b1_ref[...],
            0.0)
        tb = (jnp.dot(h1, wf_ref[...], preferred_element_type=jnp.float32) + bf_ref[...])
        tb_ref[...] = tb                                    # lane-dense, sublane-aligned store

        # ---- gather the B logistic-head rows via a one-hot matmul, accumulated ----
        head_scr[...] += jnp.dot(sel_ref[...], tb, preferred_element_type=jnp.float32)

        @pl.when(step == pl.num_programs(0) - 1)
        def _finalize():
            tb_head = head_scr[...]                                             # (B_pad, LANE)
            logits = jnp.sum(obsm_ref[...] * tb_head, axis=-1, keepdims=True)   # (B_pad, 1)
            logits_beta = jnp.sum(actm_ref[...] * tb_head, axis=-1, keepdims=True)
            off = off_ref[...]                                                  # (B_pad, 1)
            x = logits + off
            prob = 0.5 * (jnp.tanh(0.5 * x) + 1.0)          # exact sigmoid, single EUP op
            off_new = off * (1.0 - alpha) + alpha * logits_beta
            # pack [hidden (lanes 0..H-1) | prob (lane H) | new_offset (lane H+1) | 0...]
            lane = jax.lax.broadcasted_iota(jnp.int32, (B_pad, LANE), 1)
            misc_ref[...] = jnp.where(lane == H, prob,
                                      jnp.where(lane == H + 1, off_new, h))

    return kernel


def contextualized_sigmoid_forward(params, context, observation, target, offset,
                                   alpha=0.8, t_chunk=None):
    """JAX/Pallas equivalent of contextualized_sigmoid.forward (explicit-theta path).

    Returns (prob, hidden, theta, beta, new_offset) with the same shapes as PyTorch:
      prob (B,), hidden (1, B, H), theta (B*T, F), beta (B*T, F+1), new_offset (B,).
    """
    B, T, C = context.shape
    H = params["w_hh"].shape[0]
    F = observation.shape[-1] - 1            # feature_size = input_size - 1
    W = 2 * F + 1
    assert W <= LANE and H + 2 <= LANE

    B_pad = ((B + 7) // 8) * 8               # sublane-aligned batch rows
    if t_chunk is None:                      # largest divisor of T that is <= 8
        t_chunk = next(tc for tc in range(min(T, 8), 0, -1) if T % tc == 0)
    assert T % t_chunk == 0
    NC = T // t_chunk
    TCB = t_chunk * B_pad

    f32 = jnp.float32
    # t-major, batch-padded flatten of the context: row t*B_pad + b = context[b, t]
    ctx_pad = jnp.zeros((B_pad, T, C), f32).at[:B].set(context.astype(f32))
    ctx_flat = jnp.transpose(ctx_pad, (1, 0, 2)).reshape(T * B_pad, C)

    obs_f = observation[:, 0, :F].astype(f32)                           # (B, F)
    act = jnp.concatenate([obs_f, target[:, 0, :].astype(f32)], -1)     # (B, F+1)
    obs_mask = jnp.zeros((B_pad, LANE), f32).at[:B, :F].set(obs_f)      # theta multiplier
    act_mask = jnp.zeros((B_pad, LANE), f32).at[:B, F:W].set(act)       # beta multiplier
    off2 = jnp.zeros((B_pad, 1), f32).at[:B, 0].set(jnp.asarray(offset, f32).reshape(B))

    # lane-padded weights (pad lanes / rows are zero so padded lanes stay exactly 0)
    wih_pad = jnp.zeros((C, LANE), f32).at[:, :H].set(params["w_ih"].T.astype(f32))
    whh_pad = jnp.zeros((LANE, LANE), f32).at[:H, :H].set(params["w_hh"].T.astype(f32))
    brnn_pad = jnp.zeros((1, LANE), f32).at[0, :H].set(
        (params["b_ih"] + params["b_hh"]).astype(f32))
    w1_pad = jnp.zeros((LANE, LANE), f32).at[:H, :H].set(params["w1"].T.astype(f32))
    b1_pad = jnp.zeros((1, LANE), f32).at[0, :H].set(params["b1"].astype(f32))
    wf_pad = jnp.zeros((LANE, LANE), f32).at[:H, :W].set(params["wf"].T.astype(f32))
    bf_pad = jnp.zeros((1, LANE), f32).at[0, :W].set(params["bf"].astype(f32))

    # one-hot selector for the logistic-head rows: b-major row i lives at
    # t-major row (i % T) * B_pad + (i // T); split per T-chunk for the grid.
    idx = jnp.arange(B)
    rows = (idx % T) * B_pad + (idx // T)
    sel = jnp.zeros((B_pad, T * B_pad), f32).at[idx, rows].set(1.0)
    sel3 = sel.reshape(B_pad, NC, TCB).transpose(1, 0, 2)               # (NC, B_pad, TCB)

    kernel = _make_kernel(B_pad, t_chunk, H, alpha)

    def const(shape):
        return pl.BlockSpec(shape, lambda t, _n=len(shape): (0,) * _n)

    in_specs = [
        pl.BlockSpec((TCB, C), lambda t: (t, 0)),               # ctx_flat (per chunk)
        pl.BlockSpec((None, B_pad, TCB), lambda t: (t, 0, 0)),  # sel3     (per chunk)
        const((B_pad, LANE)),                                   # obs_mask
        const((B_pad, LANE)),                                   # act_mask
        const((B_pad, 1)),                                      # offset
        const((C, LANE)),                                       # W_ih^T
        const((LANE, LANE)),                                    # W_hh^T
        const((1, LANE)),                                       # b_ih + b_hh
        const((LANE, LANE)),                                    # W1^T
        const((1, LANE)),                                       # b1
        const((LANE, LANE)),                                    # Wf^T
        const((1, LANE)),                                       # bf
    ]
    out_specs = (
        pl.BlockSpec((TCB, LANE), lambda t: (t, 0)),            # theta_beta, t-major
        pl.BlockSpec((B_pad, LANE), lambda t: (0, 0)),          # misc slab (hidden|prob|off)
    )
    out_shape = (
        jax.ShapeDtypeStruct((T * B_pad, LANE), f32),
        jax.ShapeDtypeStruct((B_pad, LANE), f32),
    )

    tb_t, misc = pl.pallas_call(
        kernel,
        out_shape=out_shape,
        grid=(NC,),
        in_specs=in_specs,
        out_specs=out_specs,
        scratch_shapes=[pltpu.VMEM((B_pad, LANE), f32),   # running hidden state
                        pltpu.VMEM((B_pad, LANE), f32)],  # logistic-head accumulator
        compiler_params=pltpu.CompilerParams(
            dimension_semantics=("arbitrary",),           # serial recurrence over T-chunks
            vmem_limit_bytes=32 * 1024 * 1024),
    )(ctx_flat, sel3, obs_mask, act_mask, off2,
      wih_pad, whh_pad, brnn_pad, w1_pad, b1_pad, wf_pad, bf_pad)

    # undo the t-major / padded layout and strip lane padding (cheap XLA plumbing)
    tb_b = (tb_t.reshape(T, B_pad, LANE)[:, :B, :]
            .transpose(1, 0, 2).reshape(B * T, LANE))
    theta = tb_b[:, :F]
    beta = tb_b[:, F:W]
    hidden = misc[:B, :H][None]              # (n_layers=1, B, H)
    prob = misc[:B, H]
    new_offset = misc[:B, H + 1]
    return prob, hidden, theta, beta, new_offset


def reference_forward(params, context, observation, target, offset, alpha=0.8):
    """Pure-JAX mirror of the PyTorch forward (for correctness checking)."""
    B, T, C = context.shape
    H = params["w_hh"].shape[0]
    F = observation.shape[-1] - 1
    obs_f = observation[:, :, :F]
    h = jnp.zeros((B, H), jnp.float32)
    outs = []
    for t in range(T):
        x_t = context[:, t, :]
        h = jnp.tanh(x_t @ params["w_ih"].T + params["b_ih"]
                     + h @ params["w_hh"].T + params["b_hh"])
        outs.append(h)
    rnn_out = jnp.stack(outs, axis=1)                    # (B, T, H)
    hidden = h[None]
    r = jnp.maximum(rnn_out.reshape(-1, H), 0.0)
    r = jnp.maximum(r @ params["w1"].T + params["b1"], 0.0)
    tb = r @ params["wf"].T + params["bf"]               # (B*T, 2F+1)
    theta, beta = tb[:, :F], tb[:, F:]
    action_obs = jnp.concatenate([obs_f, target], axis=-1)
    logits = jnp.diagonal(obs_f[:, 0, :] @ theta.T)
    logits_beta = jnp.diagonal(action_obs[:, 0, :] @ beta.T)
    prob = 1.0 / (1.0 + jnp.exp(-(logits + offset)))
    new_off = offset * (1.0 - alpha) + alpha * logits_beta
    return prob, hidden, theta, beta, new_off


if __name__ == "__main__":
    B, T = 4, 8
    hidden_dim, context_size, input_size = 16, 6, 6
    feature_size = input_size - 1
    alpha = 0.8

    key = jax.random.PRNGKey(0)
    keys = jax.random.split(key, 12)
    s = 1.0 / jnp.sqrt(hidden_dim).astype(jnp.float32)
    params = {
        "w_ih": jax.random.uniform(keys[0], (hidden_dim, context_size), jnp.float32, -s, s),
        "w_hh": jax.random.uniform(keys[1], (hidden_dim, hidden_dim), jnp.float32, -s, s),
        "b_ih": jax.random.uniform(keys[2], (hidden_dim,), jnp.float32, -s, s),
        "b_hh": jax.random.uniform(keys[3], (hidden_dim,), jnp.float32, -s, s),
        "w1":   jax.random.uniform(keys[4], (hidden_dim, hidden_dim), jnp.float32, -s, s),
        "b1":   jax.random.uniform(keys[5], (hidden_dim,), jnp.float32, -s, s),
        "wf":   jax.random.uniform(keys[6], (2 * feature_size + 1, hidden_dim), jnp.float32, -s, s),
        "bf":   jax.random.uniform(keys[7], (2 * feature_size + 1,), jnp.float32, -s, s),
    }

    context = jax.random.normal(keys[8], (B, T, context_size), jnp.float32)
    observation = jax.random.normal(keys[9], (B, 1, input_size), jnp.float32)
    target = jax.random.normal(keys[10], (B, 1, 1), jnp.float32)
    offset = jax.random.normal(keys[11], (B,), jnp.float32) * 0.1

    out = contextualized_sigmoid_forward(params, context, observation, target, offset,
                                         alpha, t_chunk=4)   # 2 grid chunks over T
    out = jax.block_until_ready(out)
    ref = reference_forward(params, context, observation, target, offset, alpha)

    names = ["prob", "hidden", "theta", "beta", "offset"]
    for name, a, b in zip(names, out, ref):
        assert a.shape == b.shape, (name, a.shape, b.shape)
        assert jnp.allclose(a, b, rtol=1e-3, atol=1e-3), (name, a, b)

    print("KERNEL_OK")
</pallas_src>

<mosaic_0001>
module attributes {stable_mosaic.version = 11 : i64} {
  func.func @kernel(%arg0: i32, %arg1: memref<32x6xf32, #tpu.memory_space<vmem>>, %arg2: memref<1x8x32xf32, #tpu.memory_space<vmem>>, %arg3: memref<8x128xf32, #tpu.memory_space<vmem>>, %arg4: memref<8x128xf32, #tpu.memory_space<vmem>>, %arg5: memref<8x1xf32, #tpu.memory_space<vmem>>, %arg6: memref<6x128xf32, #tpu.memory_space<vmem>>, %arg7: memref<128x128xf32, #tpu.memory_space<vmem>>, %arg8: memref<1x128xf32, #tpu.memory_space<vmem>>, %arg9: memref<128x128xf32, #tpu.memory_space<vmem>>, %arg10: memref<1x128xf32, #tpu.memory_space<vmem>>, %arg11: memref<128x128xf32, #tpu.memory_space<vmem>>, %arg12: memref<1x128xf32, #tpu.memory_space<vmem>>, %arg13: memref<32x128xf32, #tpu.memory_space<vmem>>, %arg14: memref<8x128xf32, #tpu.memory_space<vmem>>, %arg15: memref<8x128xf32, #tpu.memory_space<vmem>>, %arg16: memref<8x128xf32, #tpu.memory_space<vmem>>) attributes {dimension_semantics = [#tpu.dimension_semantics<arbitrary>], iteration_bounds = array<i64: 2>, scalar_prefetch = 0 : i64, scratch_operands = 2 : i64, tpu.core_type = #tpu.core_type<tc>, window_params = [{transform_indices = @transform_0, window_bounds = array<i64: 32, 6>}, {transform_indices = @transform_1, window_bounds = array<i64: 1, 8, 32>}, {pipeline_mode = #tpu.pipeline_mode<synchronous>, transform_indices = @transform_2, window_bounds = array<i64: 8, 128>}, {pipeline_mode = #tpu.pipeline_mode<synchronous>, transform_indices = @transform_3, window_bounds = array<i64: 8, 128>}, {pipeline_mode = #tpu.pipeline_mode<synchronous>, transform_indices = @transform_4, window_bounds = array<i64: 8, 1>}, {pipeline_mode = #tpu.pipeline_mode<synchronous>, transform_indices = @transform_5, window_bounds = array<i64: 6, 128>}, {pipeline_mode = #tpu.pipeline_mode<synchronous>, transform_indices = @transform_6, window_bounds = array<i64: 128, 128>}, {pipeline_mode = #tpu.pipeline_mode<synchronous>, transform_indices = @transform_7, window_bounds = array<i64: 1, 128>}, {pipeline_mode = #tpu.pipeline_mode<synchronous>, transform_indices = @transform_8, window_bounds = array<i64: 128, 128>}, {pipeline_mode = #tpu.pipeline_mode<synchronous>, transform_indices = @transform_9, window_bounds = array<i64: 1, 128>}, {pipeline_mode = #tpu.pipeline_mode<synchronous>, transform_indices = @transform_10, window_bounds = array<i64: 128, 128>}, {pipeline_mode = #tpu.pipeline_mode<synchronous>, transform_indices = @transform_11, window_bounds = array<i64: 1, 128>}, {transform_indices = @transform_12, window_bounds = array<i64: 32, 128>}, {pipeline_mode = #tpu.pipeline_mode<synchronous>, transform_indices = @transform_13, window_bounds = array<i64: 8, 128>}]} {
    %c0_i32 = arith.constant 0 : i32
    %0 = arith.cmpi eq, %arg0, %c0_i32 : i32
    %1 = arith.extui %0 : i1 to i32
    %c0_i32_0 = arith.constant 0 : i32
    %2 = arith.cmpi ne, %1, %c0_i32_0 : i32
    scf.if %2 {
      %cst_39 = arith.constant 0.000000e+00 : f32
      %53 = vector.broadcast %cst_39 : f32 to vector<8x128xf32>
      %c0_40 = arith.constant 0 : index
      %c0_41 = arith.constant 0 : index
      %54 = vector.load %arg15[%c0_40, %c0_41] : memref<8x128xf32, #tpu.memory_space<vmem>>, vector<8x128xf32>
      tpu.vector_store %arg15[%c0_40, %c0_41], %53 {strides = array<i32>} : memref<8x128xf32, #tpu.memory_space<vmem>>, vector<8x128xf32>,
      %cst_42 = arith.constant 0.000000e+00 : f32
      %55 = vector.broadcast %cst_42 : f32 to vector<8x128xf32>
      %c0_43 = arith.constant 0 : index
      %c0_44 = arith.constant 0 : index
      %56 = vector.load %arg16[%c0_43, %c0_44] : memref<8x128xf32, #tpu.memory_space<vmem>>, vector<8x128xf32>
      tpu.vector_store %arg16[%c0_43, %c0_44], %55 {strides = array<i32>} : memref<8x128xf32, #tpu.memory_space<vmem>>, vector<8x128xf32>,
    } else {
    }
    %c0 = arith.constant 0 : index
    %c0_1 = arith.constant 0 : index
    %3 = vector.load %arg7[%c0, %c0_1] : memref<128x128xf32, #tpu.memory_space<vmem>>, vector<128x128xf32>
    %c0_2 = arith.constant 0 : index
    %c0_3 = arith.constant 0 : index
    %4 = vector.load %arg1[%c0_2, %c0_3] : memref<32x6xf32, #tpu.memory_space<vmem>>, vector<32x6xf32>
    %c0_4 = arith.constant 0 : index
    %c0_5 = arith.constant 0 : index
    %5 = vector.load %arg6[%c0_4, %c0_5] : memref<6x128xf32, #tpu.memory_space<vmem>>, vector<6x128xf32>
    %cst = arith.constant dense<0.000000e+00> : vector<32x128xf32>
    %6 = tpu.matmul %4, %5, %cst {dimension_numbers = #tpu.dot_dimension_numbers<[1], [0], [0], [1], [0, 0, 1, 1], [], []>} : vector<32x6xf32>, vector<6x128xf32>, vector<32x128xf32> -> vector<32x128xf32>
    %c0_6 = arith.constant 0 : index
    %c0_7 = arith.constant 0 : index
    %7 = vector.load %arg8[%c0_6, %c0_7] : memref<1x128xf32, #tpu.memory_space<vmem>>, vector<1x128xf32>
    %8 = vector.broadcast %7 : vector<1x128xf32> to vector<32x128xf32>
    %9 = arith.addf %6, %8 : vector<32x128xf32>
    %c0_8 = arith.constant 0 : index
    %c0_9 = arith.constant 0 : index
    %10 = vector.load %arg15[%c0_8, %c0_9] : memref<8x128xf32, #tpu.memory_space<vmem>>, vector<8x128xf32>
    %11 = vector.extract_strided_slice %9 {offsets = [0, 0], sizes = [8, 128], strides = [1, 1]} : vector<32x128xf32> to vector<8x128xf32>
    %cst_10 = arith.constant dense<0.000000e+00> : vector<8x128xf32>
    %12 = tpu.matmul %10, %3, %cst_10 {dimension_numbers = #tpu.dot_dimension_numbers<[1], [0], [0], [1], [0, 0, 1, 1], [], []>} : vector<8x128xf32>, vector<128x128xf32>, vector<8x128xf32> -> vector<8x128xf32>
    %13 = arith.addf %11, %12 : vector<8x128xf32>
    %14 = math.tanh %13 : vector<8x128xf32>
    %15 = vector.extract_strided_slice %9 {offsets = [8, 0], sizes = [8, 128], strides = [1, 1]} : vector<32x128xf32> to vector<8x128xf32>
    %cst_11 = arith.constant dense<0.000000e+00> : vector<8x128xf32>
    %16 = tpu.matmul %14, %3, %cst_11 {dimension_numbers = #tpu.dot_dimension_numbers<[1], [0], [0], [1], [0, 0, 1, 1], [], []>} : vector<8x128xf32>, vector<128x128xf32>, vector<8x128xf32> -> vector<8x128xf32>
    %17 = arith.addf %15, %16 : vector<8x128xf32>
    %18 = math.tanh %17 : vector<8x128xf32>
    %19 = vector.extract_strided_slice %9 {offsets = [16, 0], sizes = [8, 128], strides = [1, 1]} : vector<32x128xf32> to vector<8x128xf32>
    %cst_12 = arith.constant dense<0.000000e+00> : vector<8x128xf32>
    %20 = tpu.matmul %18, %3, %cst_12 {dimension_numbers = #tpu.dot_dimension_numbers<[1], [0], [0], [1], [0, 0, 1, 1], [], []>} : vector<8x128xf32>, vector<128x128xf32>, vector<8x128xf32> -> vector<8x128xf32>
    %21 = arith.addf %19, %20 : vector<8x128xf32>
    %22 = math.tanh %21 : vector<8x128xf32>
    %23 = vector.extract_strided_slice %9 {offsets = [24, 0], sizes = [8, 128], strides = [1, 1]} : vector<32x128xf32> to vector<8x128xf32>
    %cst_13 = arith.constant dense<0.000000e+00> : vector<8x128xf32>
    %24 = tpu.matmul %22, %3, %cst_13 {dimension_numbers = #tpu.dot_dimension_numbers<[1], [0], [0], [1], [0, 0, 1, 1], [], []>} : vector<8x128xf32>, vector<128x128xf32>, vector<8x128xf32> -> vector<8x128xf32>
    %25 = arith.addf %23, %24 : vector<8x128xf32>
    %26 = math.tanh %25 : vector<8x128xf32>
    %c0_14 = arith.constant 0 : index
    %c0_15 = arith.constant 0 : index
    %27 = vector.load %arg15[%c0_14, %c0_15] : memref<8x128xf32, #tpu.memory_space<vmem>>, vector<8x128xf32>
    tpu.vector_store %arg15[%c0_14, %c0_15], %26 {strides = array<i32>} : memref<8x128xf32, #tpu.memory_space<vmem>>, vector<8x128xf32>,
    %28 = tpu.concatenate %14, %18, %22, %26 in 0 : vector<8x128xf32>, vector<8x128xf32>, vector<8x128xf32>, vector<8x128xf32> -> vector<32x128xf32>
    %cst_16 = arith.constant 0.000000e+00 : f32
    %29 = vector.broadcast %cst_16 : f32 to vector<32x128xf32>
    %30 = arith.maximumf %28, %29 : vector<32x128xf32>
    %c0_17 = arith.constant 0 : index
    %c0_18 = arith.constant 0 : index
    %31 = vector.load %arg9[%c0_17, %c0_18] : memref<128x128xf32, #tpu.memory_space<vmem>>, vector<128x128xf32>
    %cst_19 = arith.constant dense<0.000000e+00> : vector<32x128xf32>
    %32 = tpu.matmul %30, %31, %cst_19 {dimension_numbers = #tpu.dot_dimension_numbers<[1], [0], [0], [1], [0, 0, 1, 1], [], []>} : vector<32x128xf32>, vector<128x128xf32>, vector<32x128xf32> -> vector<32x128xf32>
    %c0_20 = arith.constant 0 : index
    %c0_21 = arith.constant 0 : index
    %33 = vector.load %arg10[%c0_20, %c0_21] : memref<1x128xf32, #tpu.memory_space<vmem>>, vector<1x128xf32>
    %34 = vector.broadcast %33 : vector<1x128xf32> to vector<32x128xf32>
    %35 = arith.addf %32, %34 : vector<32x128xf32>
    %cst_22 = arith.constant 0.000000e+00 : f32
    %36 = vector.broadcast %cst_22 : f32 to vector<32x128xf32>
    %37 = arith.maximumf %35, %36 : vector<32x128xf32>
    %c0_23 = arith.constant 0 : index
    %c0_24 = arith.constant 0 : index
    %38 = vector.load %arg11[%c0_23, %c0_24] : memref<128x128xf32, #tpu.memory_space<vmem>>, vector<128x128xf32>
    %cst_25 = arith.constant dense<0.000000e+00> : vector<32x128xf32>
    %39 = tpu.matmul %37, %38, %cst_25 {dimension_numbers = #tpu.dot_dimension_numbers<[1], [0], [0], [1], [0, 0, 1, 1], [], []>} : vector<32x128xf32>, vector<128x128xf32>, vector<32x128xf32> -> vector<32x128xf32>
    %c0_26 = arith.constant 0 : index
    %c0_27 = arith.constant 0 : index
    %40 = vector.load %arg12[%c0_26, %c0_27] : memref<1x128xf32, #tpu.memory_space<vmem>>, vector<1x128xf32>
    %41 = vector.broadcast %40 : vector<1x128xf32> to vector<32x128xf32>
    %42 = arith.addf %39, %41 : vector<32x128xf32>
    %c0_28 = arith.constant 0 : index
    %c0_29 = arith.constant 0 : index
    %43 = vector.load %arg13[%c0_28, %c0_29] : memref<32x128xf32, #tpu.memory_space<vmem>>, vector<32x128xf32>
    tpu.vector_store %arg13[%c0_28, %c0_29], %42 {strides = array<i32>} : memref<32x128xf32, #tpu.memory_space<vmem>>, vector<32x128xf32>,
    %c0_30 = arith.constant 0 : index
    %c0_31 = arith.constant 0 : index
    %44 = vector.load %arg16[%c0_30, %c0_31] : memref<8x128xf32, #tpu.memory_space<vmem>>, vector<8x128xf32>
    %c0_32 = arith.constant 0 : index
    %c0_33 = arith.constant 0 : index
    %c0_34 = arith.constant 0 : index
    %45 = vector.load %arg2[%c0_32, %c0_33, %c0_34] : memref<1x8x32xf32, #tpu.memory_space<vmem>>, vector<1x8x32xf32>
    %46 = vector.shape_cast %45 : vector<1x8x32xf32> to vector<8x32xf32>
    %cst_35 = arith.constant dense<0.000000e+00> : vector<8x128xf32>
    %47 = tpu.matmul %46, %42, %cst_35 {dimension_numbers = #tpu.dot_dimension_numbers<[1], [0], [0], [1], [0, 0, 1, 1], [], []>} : vector<8x32xf32>, vector<32x128xf32>, vector<8x128xf32> -> vector<8x128xf32>
    %48 = arith.addf %44, %47 : vector<8x128xf32>
    %c0_36 = arith.constant 0 : index
    %c0_37 = arith.constant 0 : index
    %49 = vector.load %arg16[%c0_36, %c0_37] : memref<8x128xf32, #tpu.memory_space<vmem>>, vector<8x128xf32>
    tpu.vector_store %arg16[%c0_36, %c0_37], %48 {strides = array<i32>} : memref<8x128xf32, #tpu.memory_space<vmem>>, vector<8x128xf32>,
    %c1_i32 = arith.constant 1 : i32
    %50 = arith.cmpi eq, %arg0, %c1_i32 : i32
    %51 = arith.extui %50 : i1 to i32
    %c0_i32_38 = arith.constant 0 : i32
    %52 = arith.cmpi ne, %51, %c0_i32_38 : i32
    scf.if %52 {
      %c0_39 = arith.constant 0 : index
      %c0_40 = arith.constant 0 : index
      %53 = vector.load %arg16[%c0_39, %c0_40] : memref<8x128xf32, #tpu.memory_space<vmem>>, vector<8x128xf32>
      %c0_41 = arith.constant 0 : index
      %c0_42 = arith.constant 0 : index
      %54 = vector.load %arg3[%c0_41, %c0_42] : memref<8x128xf32, #tpu.memory_space<vmem>>, vector<8x128xf32>
      %55 = arith.mulf %54, %53 : vector<8x128xf32>
      %cst_43 = arith.constant dense<0.000000e+00> : vector<8xf32>
      %56 = vector.multi_reduction <add>, %55, %cst_43 [1] : vector<8x128xf32> to vector<8xf32>
      %57 = vector.shape_cast %56 : vector<8xf32> to vector<8x1xf32>
      %c0_44 = arith.constant 0 : index
      %c0_45 = arith.constant 0 : index
      %58 = vector.load %arg4[%c0_44, %c0_45] : memref<8x128xf32, #tpu.memory_space<vmem>>, vector<8x128xf32>
      %59 = arith.mulf %58, %53 : vector<8x128xf32>
      %cst_46 = arith.constant dense<0.000000e+00> : vector<8xf32>
      %60 = vector.multi_reduction <add>, %59, %cst_46 [1] : vector<8x128xf32> to vector<8xf32>
      %61 = vector.shape_cast %60 : vector<8xf32> to vector<8x1xf32>
      %c0_47 = arith.constant 0 : index
      %c0_48 = arith.constant 0 : index
      %62 = vector.load %arg5[%c0_47, %c0_48] : memref<8x1xf32, #tpu.memory_space<vmem>>, vector<8x1xf32>
      %63 = arith.addf %57, %62 : vector<8x1xf32>
      %cst_49 = arith.constant 5.000000e-01 : f32
      %64 = vector.broadcast %cst_49 : f32 to vector<8x1xf32>
      %65 = arith.mulf %64, %63 : vector<8x1xf32>
      %66 = math.tanh %65 : vector<8x1xf32>
      %cst_50 = arith.constant 1.000000e+00 : f32
      %67 = vector.broadcast %cst_50 : f32 to vector<8x1xf32>
      %68 = arith.addf %66, %67 : vector<8x1xf32>
      %cst_51 = arith.constant 5.000000e-01 : f32
      %69 = vector.broadcast %cst_51 : f32 to vector<8x1xf32>
      %70 = arith.mulf %69, %68 : vector<8x1xf32>
      %cst_52 = arith.constant 2.000000e-01 : f32
      %71 = vector.broadcast %cst_52 : f32 to vector<8x1xf32>
      %72 = arith.mulf %62, %71 : vector<8x1xf32>
      %cst_53 = arith.constant 8.000000e-01 : f32
      %73 = vector.broadcast %cst_53 : f32 to vector<8x1xf32>
      %74 = arith.mulf %73, %61 : vector<8x1xf32>
      %75 = arith.addf %72, %74 : vector<8x1xf32>
      %76 = tpu.iota {dimensions = array<i32: 1>} : vector<8x128xi32>
      %c16_i32 = arith.constant 16 : i32
      %77 = vector.broadcast %c16_i32 : i32 to vector<8x128xi32>
      %78 = arith.cmpi eq, %76, %77 : vector<8x128xi32>
      %c17_i32 = arith.constant 17 : i32
      %79 = vector.broadcast %c17_i32 : i32 to vector<8x128xi32>
      %80 = arith.cmpi eq, %76, %79 : vector<8x128xi32>
      %81 = vector.shape_cast %75 : vector<8x1xf32> to vector<8x1xf32>
      %82 = vector.broadcast %81 : vector<8x1xf32> to vector<8x128xf32>
      %83 = arith.select %80, %82, %26 : vector<8x128xi1>, vector<8x128xf32>
      %84 = vector.shape_cast %70 : vector<8x1xf32> to vector<8x1xf32>
      %85 = vector.broadcast %84 : vector<8x1xf32> to vector<8x128xf32>
      %86 = arith.select %78, %85, %83 : vector<8x128xi1>, vector<8x128xf32>
      %c0_54 = arith.constant 0 : index
      %c0_55 = arith.constant 0 : index
      %87 = vector.load %arg14[%c0_54, %c0_55] : memref<8x128xf32, #tpu.memory_space<vmem>>, vector<8x128xf32>
      tpu.vector_store %arg14[%c0_54, %c0_55], %86 {strides = array<i32>} : memref<8x128xf32, #tpu.memory_space<vmem>>, vector<8x128xf32>,
    } else {
    }
    return
  }
  func.func @transform_0(%arg0: i32) -> (i32, i32) {
    %c0_i32 = arith.constant 0 : i32
    %c0_i32_0 = arith.constant 0 : i32
    return %arg0, %c0_i32 : i32, i32
  }
  func.func @transform_1(%arg0: i32) -> (i32, i32, i32) {
    %c0_i32 = arith.constant 0 : i32
    %c0_i32_0 = arith.constant 0 : i32
    %c0_i32_1 = arith.constant 0 : i32
    return %arg0, %c0_i32, %c0_i32_0 : i32, i32, i32
  }
  func.func @transform_2(%arg0: i32) -> (i32, i32) {
    %c0_i32 = arith.constant 0 : i32
    %c0_i32_0 = arith.constant 0 : i32
    %c0_i32_1 = arith.constant 0 : i32
    return %c0_i32, %c0_i32_0 : i32, i32
  }
  func.func @transform_3(%arg0: i32) -> (i32, i32) {
    %c0_i32 = arith.constant 0 : i32
    %c0_i32_0 = arith.constant 0 : i32
    %c0_i32_1 = arith.constant 0 : i32
    return %c0_i32, %c0_i32_0 : i32, i32
  }
  func.func @transform_4(%arg0: i32) -> (i32, i32) {
    %c0_i32 = arith.constant 0 : i32
    %c0_i32_0 = arith.constant 0 : i32
    %c0_i32_1 = arith.constant 0 : i32
    return %c0_i32, %c0_i32_0 : i32, i32
  }
  func.func @transform_5(%arg0: i32) -> (i32, i32) {
    %c0_i32 = arith.constant 0 : i32
    %c0_i32_0 = arith.constant 0 : i32
    %c0_i32_1 = arith.constant 0 : i32
    return %c0_i32, %c0_i32_0 : i32, i32
  }
  func.func @transform_6(%arg0: i32) -> (i32, i32) {
    %c0_i32 = arith.constant 0 : i32
    %c0_i32_0 = arith.constant 0 : i32
    %c0_i32_1 = arith.constant 0 : i32
    return %c0_i32, %c0_i32_0 : i32, i32
  }
  func.func @transform_7(%arg0: i32) -> (i32, i32) {
    %c0_i32 = arith.constant 0 : i32
    %c0_i32_0 = arith.constant 0 : i32
    %c0_i32_1 = arith.constant 0 : i32
    return %c0_i32, %c0_i32_0 : i32, i32
  }
  func.func @transform_8(%arg0: i32) -> (i32, i32) {
    %c0_i32 = arith.constant 0 : i32
    %c0_i32_0 = arith.constant 0 : i32
    %c0_i32_1 = arith.constant 0 : i32
    return %c0_i32, %c0_i32_0 : i32, i32
  }
  func.func @transform_9(%arg0: i32) -> (i32, i32) {
    %c0_i32 = arith.constant 0 : i32
    %c0_i32_0 = arith.constant 0 : i32
    %c0_i32_1 = arith.constant 0 : i32
    return %c0_i32, %c0_i32_0 : i32, i32
  }
  func.func @transform_10(%arg0: i32) -> (i32, i32) {
    %c0_i32 = arith.constant 0 : i32
    %c0_i32_0 = arith.constant 0 : i32
    %c0_i32_1 = arith.constant 0 : i32
    return %c0_i32, %c0_i32_0 : i32, i32
  }
  func.func @transform_11(%arg0: i32) -> (i32, i32) {
    %c0_i32 = arith.constant 0 : i32
    %c0_i32_0 = arith.constant 0 : i32
    %c0_i32_1 = arith.constant 0 : i32
    return %c0_i32, %c0_i32_0 : i32, i32
  }
  func.func @transform_12(%arg0: i32) -> (i32, i32) {
    %c0_i32 = arith.constant 0 : i32
    %c0_i32_0 = arith.constant 0 : i32
    return %arg0, %c0_i32 : i32, i32
  }
  func.func @transform_13(%arg0: i32) -> (i32, i32) {
    %c0_i32 = arith.constant 0 : i32
    %c0_i32_0 = arith.constant 0 : i32
    %c0_i32_1 = arith.constant 0 : i32
    return %c0_i32, %c0_i32_0 : i32, i32
  }
}

</mosaic_0001>

<llo_original>
// kernel: tpu_custom_call.1
$region0: #{tpu_custom_call.1}
  #allocation0 [shape = 'u32[]', space=smem, size = 0x4, offset = 0x4, fixed_abs, tag = 'smem constant byte address 0x4 - core index']
  #allocation1 [shape = 'u32[144,128]{1,0:T(1,128)}', space=vmem, size = 0x12000, scoped, tag = 'internal scratch']
  #allocation2 [shape = 'f32[8,128]{1,0:T(8,128)}', space=vmem, size = 0x1000, scoped, tag = 'scratch operand']
  #allocation3 [shape = 'f32[8,128]{1,0:T(8,128)}', space=vmem, size = 0x1000, scoped, tag = 'scratch operand']
  %s0 = inlined_call_operand.vmem [shape: f32[64,6], index: 0, kind: input, shape index: {}]
  %s1 = inlined_call_operand.vmem [shape: f32[2,8,32], index: 1, kind: input, shape index: {}]
  %s2 = inlined_call_operand.vmem [shape: f32[8,128], index: 2, kind: input, shape index: {}]
  %s3 = inlined_call_operand.vmem [shape: f32[8,128], index: 3, kind: input, shape index: {}]
  %s4 = inlined_call_operand.vmem [shape: f32[8,1], index: 4, kind: input, shape index: {}]
  %s5 = inlined_call_operand.vmem [shape: f32[6,128], index: 5, kind: input, shape index: {}]
  %s6 = inlined_call_operand.hbm [shape: f32[128,128], index: 6, kind: input, shape index: {}]
  %s7 = inlined_call_operand.vmem [shape: f32[1,128], index: 7, kind: input, shape index: {}]
  %s8 = inlined_call_operand.hbm [shape: f32[128,128], index: 8, kind: input, shape index: {}]
  %s9 = inlined_call_operand.vmem [shape: f32[1,128], index: 9, kind: input, shape index: {}]
  %s10 = inlined_call_operand.hbm [shape: f32[128,128], index: 10, kind: input, shape index: {}]
  %s11 = inlined_call_operand.vmem [shape: f32[1,128], index: 11, kind: input, shape index: {}]
  %s12 = inlined_call_operand.hbm [shape: f32[64,128], index: 12, kind: output, shape index: {0}]
  %s13 = inlined_call_operand.hbm [shape: f32[8,128], index: 13, kind: output, shape index: {1}]
  %14 = xla_tuple %s12, %s13
  %s15 = sld [smem:[#allocation0]]
  $region109: #{tpu_custom_call.1} parent=0
    _
  %s17 = ssub.s32 1, %s15
  %s18 = scalar_select 0, %s17, %s15
  $region1: #{tpu_custom_call.1} parent=0
    #allocation4 [shape = 'u8[65536]{0}', space=vmem, size = 0x10000, scoped, tag = 'input window, operand 6, single buffered']
    #allocation5 [shape = 's32[2]{0}', space=sflag, size = 0x8, scoped, tag = 'scoped memory for tpu_custom_call.1']
    #allocation6 [shape = 's32[2]{0}', space=sflag, size = 0x8, scoped, tag = 'scoped memory for tpu_custom_call.1']
    #allocation7 [shape = 'u8[65536]{0}', space=vmem, size = 0x10000, scoped, tag = 'input window, operand 8, single buffered']
    #allocation8 [shape = 's32[1]{0}', space=sflag, size = 0x4, scoped, tag = 'scoped memory for tpu_custom_call.1']
    #allocation9 [shape = 'u8[65536]{0}', space=vmem, size = 0x10000, scoped, tag = 'input window, operand 10, single buffered']
    #allocation10 [shape = 'u8[32768]{0}', space=vmem, size = 0x8000, scoped, tag = 'output window, operand 0']
    #allocation11 [shape = 'u8[4096]{0}', space=vmem, size = 0x1000, scoped, tag = 'output window, operand 1, single buffered']
    #allocation12 [shape = 's32[1]{0}', space=sflag, size = 0x4, scoped, tag = 'scoped memory for tpu_custom_call.1']
    %19 = vsyncpa [#allocation5], 0
    %20 = vsyncpa [#allocation8], 0
    %21 = vsyncpa [#allocation6], 0
    %s22 = scalar_lea.sflag [#allocation6], 1
    %23 = vsyncpa %s22, 0
    %24 = vsyncpa [#allocation12], 0
    loop: start=0, step=1, limit=4
    $region2: #{tpu_custom_call.1} parent=1 // loop_pre_header
      _
    $region3: #{tpu_custom_call.1} parent=1 // loop_header
      %s26 = sphi 0, %s30
      %p27 = scmp.ge.s32.totalorder %s26, 4
      %s36 = sphi 0, %s38
      %s39 = sphi 0, %s36
      %s40 = sphi 0, %s39
      %s56 = sphi 0, %s40
      %s62 = sphi 0, %s64
      %s65 = sphi 0, %s62
      %s66 = sphi 0, %s65
      %s82 = sphi 0, %s66
      %s86 = sphi 0, %s86
      %s88 = sphi 0, %s86
      %s89 = sphi 0, %s88
      %s103 = sphi 0, %s89
      %s107 = sphi 0, %s107
      %s109 = sphi 0, %s107
      %s110 = sphi 0, %s109
      %s124 = sphi 0, %s110
      %s128 = sphi 0, %s128
      %s130 = sphi 0, %s128
      %s131 = sphi 0, %s130
      %s145 = sphi 0, %s131
      %s149 = sphi 0, %s149
      %s151 = sphi 0, %s149
      %s152 = sphi 0, %s151
      %s166 = sphi 0, %s152
      %s170 = sphi 0, %s170
      %s172 = sphi 0, %s170
      %s173 = sphi 0, %s172
      %s187 = sphi 0, %s173
      %s191 = sphi 0, %s191
      %s193 = sphi 0, %s191
      %s194 = sphi 0, %s193
      %s208 = sphi 0, %s194
      %s212 = sphi 0, %s212
      %s214 = sphi 0, %s212
      %s215 = sphi 0, %s214
      %s229 = sphi 0, %s215
      %s233 = sphi 0, %s233
      %s235 = sphi 0, %s233
      %s236 = sphi 0, %s235
      %s250 = sphi 0, %s236
      %s254 = sphi 0, %s254
      %s256 = sphi 0, %s254
      %s257 = sphi 0, %s256
      %s271 = sphi 0, %s257
      %s275 = sphi 0, %s275
      %s277 = sphi 0, %s275
      %s278 = sphi 0, %s277
      %s292 = sphi 0, %s278
      %s298 = sphi 0, %s300
      %s301 = sphi 0, %s298
      %s302 = sphi 0, %s301
      %s318 = sphi 0, %s302
      %s322 = sphi 0, %s322
      %s324 = sphi 0, %s322
      %s325 = sphi 0, %s324
      %s339 = sphi 0, %s325
    $region4: #{tpu_custom_call.1} parent=1 // loop_header_branch
      %29 = sbr.rel (%p27) target = $region8
    $region5: #{tpu_custom_call.1} parent=1 // loop_body
      %s31 = ssub.s32 %s26, 1
      %s32 = ssub.s32 %s26, 2
      %s33 = sadd.s32 %s26, 1
      %s34 = ssub.s32 %s26, %s33
      %p35 = scmp.eq.s32.totalorder %s34, 0
      %s37 = sadd.s32 %s36, 1
      %s38 = scalar_select %p35, %s36, %s37
      %p41 = pneg %p35
      %p42 = scmp.eq.s32.totalorder %s26, 1
      %p43 = por %p41, %p42
      %p44 = scmp.ne.s32.totalorder %s36, %s39
      %p45 = scmp.eq.s32.totalorder %s26, 0
      %p46 = por %p44, %p45
      %p47 = scmp.ne.s32.totalorder %s36, %s39
      %p48 = scmp.eq.s32.totalorder %s31, 1
      %p49 = por %p47, %p48
      %p50 = scmp.ne.s32.totalorder %s39, %s40
      %p51 = scmp.eq.s32.totalorder %s31, 0
      %p52 = por %p50, %p51
      %p53 = scmp.ne.s32.totalorder %s39, %s40
      %p54 = scmp.eq.s32.totalorder %s32, 1
      %p55 = por %p53, %p54
      %p57 = scmp.ne.s32.totalorder %s40, %s56
      %p58 = scmp.eq.s32.totalorder %s32, 0
      %p59 = por %p57, %p58
      %s60 = ssub.s32 %s26, %s33
      %p61 = scmp.eq.s32.totalorder %s60, 0
      %s63 = sadd.s32 %s62, 1
      %s64 = scalar_select %p61, %s62, %s63
      %p67 = pneg %p61
      %p68 = scmp.eq.s32.totalorder %s26, 1
      %p69 = por %p67, %p68
      %p70 = scmp.ne.s32.totalorder %s62, %s65
      %p71 = scmp.eq.s32.totalorder %s26, 0
      %p72 = por %p70, %p71
      %p73 = scmp.ne.s32.totalorder %s62, %s65
      %p74 = scmp.eq.s32.totalorder %s31, 1
      %p75 = por %p73, %p74
      %p76 = scmp.ne.s32.totalorder %s65, %s66
      %p77 = scmp.eq.s32.totalorder %s31, 0
      %p78 = por %p76, %p77
      %p79 = scmp.ne.s32.totalorder %s65, %s66
      %p80 = scmp.eq.s32.totalorder %s32, 1
      %p81 = por %p79, %p80
      %p83 = scmp.ne.s32.totalorder %s66, %s82
      %p84 = scmp.eq.s32.totalorder %s32, 0
      %p85 = por %p83, %p84
      %s87 = sadd.s32 %s86, 1
      %p90 = scmp.eq.s32.totalorder %s26, 1
      %p91 = scmp.ne.s32.totalorder %s86, %s88
      %p92 = scmp.eq.s32.totalorder %s26, 0
      %p93 = por %p91, %p92
      %p94 = scmp.ne.s32.totalorder %s86, %s88
      %p95 = scmp.eq.s32.totalorder %s31, 1
      %p96 = por %p94, %p95
      %p97 = scmp.ne.s32.totalorder %s88, %s89
      %p98 = scmp.eq.s32.totalorder %s31, 0
      %p99 = por %p97, %p98
      %p100 = scmp.ne.s32.totalorder %s88, %s89
      %p101 = scmp.eq.s32.totalorder %s32, 1
      %p102 = por %p100, %p101
      %p104 = scmp.ne.s32.totalorder %s89, %s103
      %p105 = scmp.eq.s32.totalorder %s32, 0
      %p106 = por %p104, %p105
      %s108 = sadd.s32 %s107, 1
      %p111 = scmp.eq.s32.totalorder %s26, 1
      %p112 = scmp.ne.s32.totalorder %s107, %s109
      %p113 = scmp.eq.s32.totalorder %s26, 0
      %p114 = por %p112, %p113
      %p115 = scmp.ne.s32.totalorder %s107, %s109
      %p116 = scmp.eq.s32.totalorder %s31, 1
      %p117 = por %p115, %p116
      %p118 = scmp.ne.s32.totalorder %s109, %s110
      %p119 = scmp.eq.s32.totalorder %s31, 0
      %p120 = por %p118, %p119
      %p121 = scmp.ne.s32.totalorder %s109, %s110
      %p122 = scmp.eq.s32.totalorder %s32, 1
      %p123 = por %p121, %p122
      %p125 = scmp.ne.s32.totalorder %s110, %s124
      %p126 = scmp.eq.s32.totalorder %s32, 0
      %p127 = por %p125, %p126
      %s129 = sadd.s32 %s128, 1
      %p132 = scmp.eq.s32.totalorder %s26, 1
      %p133 = scmp.ne.s32.totalorder %s128, %s130
      %p134 = scmp.eq.s32.totalorder %s26, 0
      %p135 = por %p133, %p134
      %p136 = scmp.ne.s32.totalorder %s128, %s130
      %p137 = scmp.eq.s32.totalorder %s31, 1
      %p138 = por %p136, %p137
      %p139 = scmp.ne.s32.totalorder %s130, %s131
      %p140 = scmp.eq.s32.totalorder %s31, 0
      %p141 = por %p139, %p140
      %p142 = scmp.ne.s32.totalorder %s130, %s131
      %p143 = scmp.eq.s32.totalorder %s32, 1
      %p144 = por %p142, %p143
      %p146 = scmp.ne.s32.totalorder %s131, %s145
      %p147 = scmp.eq.s32.totalorder %s32, 0
      %p148 = por %p146, %p147
      %s150 = sadd.s32 %s149, 1
      %p153 = scmp.eq.s32.totalorder %s26, 1
      %p154 = scmp.ne.s32.totalorder %s149, %s151
      %p155 = scmp.eq.s32.totalorder %s26, 0
      %p156 = por %p154, %p155
      %p157 = scmp.ne.s32.totalorder %s149, %s151
      %p158 = scmp.eq.s32.totalorder %s31, 1
      %p159 = por %p157, %p158
      %p160 = scmp.ne.s32.totalorder %s151, %s152
      %p161 = scmp.eq.s32.totalorder %s31, 0
      %p162 = por %p160, %p161
      %p163 = scmp.ne.s32.totalorder %s151, %s152
      %p164 = scmp.eq.s32.totalorder %s32, 1
      %p165 = por %p163, %p164
      %p167 = scmp.ne.s32.totalorder %s152, %s166
      %p168 = scmp.eq.s32.totalorder %s32, 0
      %p169 = por %p167, %p168
      %s171 = sadd.s32 %s170, 1
      %p174 = scmp.eq.s32.totalorder %s26, 1
      %p175 = scmp.ne.s32.totalorder %s170, %s172
      %p176 = scmp.eq.s32.totalorder %s26, 0
      %p177 = por %p175, %p176
      %p178 = scmp.ne.s32.totalorder %s170, %s172
      %p179 = scmp.eq.s32.totalorder %s31, 1
      %p180 = por %p178, %p179
      %p181 = scmp.ne.s32.totalorder %s172, %s173
      %p182 = scmp.eq.s32.totalorder %s31, 0
      %p183 = por %p181, %p182
      %p184 = scmp.ne.s32.totalorder %s172, %s173
      %p185 = scmp.eq.s32.totalorder %s32, 1
      %p186 = por %p184, %p185
      %p188 = scmp.ne.s32.totalorder %s173, %s187
      %p189 = scmp.eq.s32.totalorder %s32, 0
      %p190 = por %p188, %p189
      %s192 = sadd.s32 %s191, 1
      %p195 = scmp.eq.s32.totalorder %s26, 1
      %p196 = scmp.ne.s32.totalorder %s191, %s193
      %p197 = scmp.eq.s32.totalorder %s26, 0
      %p198 = por %p196, %p197
      %p199 = scmp.ne.s32.totalorder %s191, %s193
      %p200 = scmp.eq.s32.totalorder %s31, 1
      %p201 = por %p199, %p200
      %p202 = scmp.ne.s32.totalorder %s193, %s194
      %p203 = scmp.eq.s32.totalorder %s31, 0
      %p204 = por %p202, %p203
      %p205 = scmp.ne.s32.totalorder %s193, %s194
      %p206 = scmp.eq.s32.totalorder %s32, 1
      %p207 = por %p205, %p206
      %p209 = scmp.ne.s32.totalorder %s194, %s208
      %p210 = scmp.eq.s32.totalorder %s32, 0
      %p211 = por %p209, %p210
      %s213 = sadd.s32 %s212, 1
      %p216 = scmp.eq.s32.totalorder %s26, 1
      %p217 = scmp.ne.s32.totalorder %s212, %s214
      %p218 = scmp.eq.s32.totalorder %s26, 0
      %p219 = por %p217, %p218
      %p220 = scmp.ne.s32.totalorder %s212, %s214
      %p221 = scmp.eq.s32.totalorder %s31, 1
      %p222 = por %p220, %p221
      %p223 = scmp.ne.s32.totalorder %s214, %s215
      %p224 = scmp.eq.s32.totalorder %s31, 0
      %p225 = por %p223, %p224
      %p226 = scmp.ne.s32.totalorder %s214, %s215
      %p227 = scmp.eq.s32.totalorder %s32, 1
      %p228 = por %p226, %p227
      %p230 = scmp.ne.s32.totalorder %s215, %s229
      %p231 = scmp.eq.s32.totalorder %s32, 0
      %p232 = por %p230, %p231
      %s234 = sadd.s32 %s233, 1
      %p237 = scmp.eq.s32.totalorder %s26, 1
      %p238 = scmp.ne.s32.totalorder %s233, %s235
      %p239 = scmp.eq.s32.totalorder %s26, 0
      %p240 = por %p238, %p239
      %p241 = scmp.ne.s32.totalorder %s233, %s235
      %p242 = scmp.eq.s32.totalorder %s31, 1
      %p243 = por %p241, %p242
      %p244 = scmp.ne.s32.totalorder %s235, %s236
      %p245 = scmp.eq.s32.totalorder %s31, 0
      %p246 = por %p244, %p245
      %p247 = scmp.ne.s32.totalorder %s235, %s236
      %p248 = scmp.eq.s32.totalorder %s32, 1
      %p249 = por %p247, %p248
      %p251 = scmp.ne.s32.totalorder %s236, %s250
      %p252 = scmp.eq.s32.totalorder %s32, 0
      %p253 = por %p251, %p252
      %s255 = sadd.s32 %s254, 1
      %p258 = scmp.eq.s32.totalorder %s26, 1
      %p259 = scmp.ne.s32.totalorder %s254, %s256
      %p260 = scmp.eq.s32.totalorder %s26, 0
      %p261 = por %p259, %p260
      %p262 = scmp.ne.s32.totalorder %s254, %s256
      %p263 = scmp.eq.s32.totalorder %s31, 1
      %p264 = por %p262, %p263
      %p265 = scmp.ne.s32.totalorder %s256, %s257
      %p266 = scmp.eq.s32.totalorder %s31, 0
      %p267 = por %p265, %p266
      %p268 = scmp.ne.s32.totalorder %s256, %s257
      %p269 = scmp.eq.s32.totalorder %s32, 1
      %p270 = por %p268, %p269
      %p272 = scmp.ne.s32.totalorder %s257, %s271
      %p273 = scmp.eq.s32.totalorder %s32, 0
      %p274 = por %p272, %p273
      %s276 = sadd.s32 %s275, 1
      %p279 = scmp.eq.s32.totalorder %s26, 1
      %p280 = scmp.ne.s32.totalorder %s275, %s277
      %p281 = scmp.eq.s32.totalorder %s26, 0
      %p282 = por %p280, %p281
      %p283 = scmp.ne.s32.totalorder %s275, %s277
      %p284 = scmp.eq.s32.totalorder %s31, 1
      %p285 = por %p283, %p284
      %p286 = scmp.ne.s32.totalorder %s277, %s278
      %p287 = scmp.eq.s32.totalorder %s31, 0
      %p288 = por %p286, %p287
      %p289 = scmp.ne.s32.totalorder %s277, %s278
      %p290 = scmp.eq.s32.totalorder %s32, 1
      %p291 = por %p289, %p290
      %p293 = scmp.ne.s32.totalorder %s278, %s292
      %p294 = scmp.eq.s32.totalorder %s32, 0
      %p295 = por %p293, %p294
      %s296 = ssub.s32 %s26, %s33
      %p297 = scmp.eq.s32.totalorder %s296, 0
      %s299 = sadd.s32 %s298, 1
      %s300 = scalar_select %p297, %s298, %s299
      %p303 = pneg %p297
      %p304 = scmp.eq.s32.totalorder %s26, 1
      %p305 = por %p303, %p304
      %p306 = scmp.ne.s32.totalorder %s298, %s301
      %p307 = scmp.eq.s32.totalorder %s26, 0
      %p308 = por %p306, %p307
      %p309 = scmp.ne.s32.totalorder %s298, %s301
      %p310 = scmp.eq.s32.totalorder %s31, 1
      %p311 = por %p309, %p310
      %p312 = scmp.ne.s32.totalorder %s301, %s302
      %p313 = scmp.eq.s32.totalorder %s31, 0
      %p314 = por %p312, %p313
      %p315 = scmp.ne.s32.totalorder %s301, %s302
      %p316 = scmp.eq.s32.totalorder %s32, 1
      %p317 = por %p315, %p316
      %p319 = scmp.ne.s32.totalorder %s302, %s318
      %p320 = scmp.eq.s32.totalorder %s32, 0
      %p321 = por %p319, %p320
      %s323 = sadd.s32 %s322, 1
      %p326 = scmp.eq.s32.totalorder %s26, 1
      %p327 = scmp.ne.s32.totalorder %s322, %s324
      %p328 = scmp.eq.s32.totalorder %s26, 0
      %p329 = por %p327, %p328
      %p330 = scmp.ne.s32.totalorder %s322, %s324
      %p331 = scmp.eq.s32.totalorder %s31, 1
      %p332 = por %p330, %p331
      %p333 = scmp.ne.s32.totalorder %s324, %s325
      %p334 = scmp.eq.s32.totalorder %s31, 0
      %p335 = por %p333, %p334
      %p336 = scmp.ne.s32.totalorder %s324, %s325
      %p337 = scmp.eq.s32.totalorder %s32, 1
      %p338 = por %p336, %p337
      %p340 = scmp.ne.s32.totalorder %s325, %s339
      %p341 = scmp.eq.s32.totalorder %s32, 0
      %p342 = por %p340, %p341
      %p343 = scmp.le.s32.totalorder 1, %s26
      %p344 = scmp.lt.s32.totalorder %s26, 3
      %p345 = pnand %p343, %p344
      %p346 = pneg %p345
      // Predicated region
      $region9: #{tpu_custom_call.1} parent=5 // pred_check
        _
      $region10: #{tpu_custom_call.1} parent=5 // pred_check_branch
        %348 = sbr.rel (%p345) target = $region12
      $region11: #{tpu_custom_call.1} parent=5 // pred_region
        %s349 = ssub.s32 %s26, 1
        // Predicated region
        $region13: #{tpu_custom_call.1} parent=11 // pred_check
          %p350 = pneg %p99
        $region14: #{tpu_custom_call.1} parent=11 // pred_check_branch
          %352 = sbr.rel (%p350) target = $region16
        $region15: #{tpu_custom_call.1} parent=11 // pred_region
          _
        $region16: #{tpu_custom_call.1} parent=11 // pred_fallthru
          _
        // Predicated region
        $region17: #{tpu_custom_call.1} parent=11 // pred_check
          %p353 = pneg %p120
        $region18: #{tpu_custom_call.1} parent=11 // pred_check_branch
          %355 = sbr.rel (%p353) target = $region20
        $region19: #{tpu_custom_call.1} parent=11 // pred_region
          _
        $region20: #{tpu_custom_call.1} parent=11 // pred_fallthru
          _
        // Predicated region
        $region21: #{tpu_custom_call.1} parent=11 // pred_check
          %p356 = pneg %p141
        $region22: #{tpu_custom_call.1} parent=11 // pred_check_branch
          %358 = sbr.rel (%p356) target = $region24
        $region23: #{tpu_custom_call.1} parent=11 // pred_region
          _
        $region24: #{tpu_custom_call.1} parent=11 // pred_fallthru
          _
        // Predicated region
        $region25: #{tpu_custom_call.1} parent=11 // pred_check
          %p359 = pneg %p162
        $region26: #{tpu_custom_call.1} parent=11 // pred_check_branch
          %361 = sbr.rel (%p359) target = $region28
        $region27: #{tpu_custom_call.1} parent=11 // pred_region
          _
        $region28: #{tpu_custom_call.1} parent=11 // pred_fallthru
          _
        // Predicated region
        $region29: #{tpu_custom_call.1} parent=11 // pred_check
          %p362 = pneg %p183
        $region30: #{tpu_custom_call.1} parent=11 // pred_check_branch
          %364 = sbr.rel (%p362) target = $region32
        $region31: #{tpu_custom_call.1} parent=11 // pred_region
          %s366 = ssub.s32 2048, 2048
          %367 = vsyncadd [#allocation5], %s366
          %s368 = sshll.u32 [#allocation4], 4
          %s369 = int_to_ptr.vmem [resolvable:$true] %s368
          %374 = dma.hbm_to_vmem [thread:$0]  %s6, 2048, %s369, [#allocation5], 128, 128, 8
        $region32: #{tpu_custom_call.1} parent=11 // pred_fallthru
          _
        // Predicated region
        $region33: #{tpu_custom_call.1} parent=11 // pred_check
          %p375 = pneg %p204
        $region34: #{tpu_custom_call.1} parent=11 // pred_check_branch
          %377 = sbr.rel (%p375) target = $region36
        $region35: #{tpu_custom_call.1} parent=11 // pred_region
          _
        $region36: #{tpu_custom_call.1} parent=11 // pred_fallthru
          _
        // Predicated region
        $region37: #{tpu_custom_call.1} parent=11 // pred_check
          %p378 = pneg %p225
        $region38: #{tpu_custom_call.1} parent=11 // pred_check_branch
          %380 = sbr.rel (%p378) target = $region40
        $region39: #{tpu_custom_call.1} parent=11 // pred_region
          %s382 = ssub.s32 2048, 2048
          %383 = vsyncadd [#allocation8], %s382
          %s384 = sshll.u32 [#allocation7], 4
          %s385 = int_to_ptr.vmem [resolvable:$true] %s384
          %390 = dma.hbm_to_vmem [thread:$0]  %s8, 2048, %s385, [#allocation8], 128, 128, 8
        $region40: #{tpu_custom_call.1} parent=11 // pred_fallthru
          _
        // Predicated region
        $region41: #{tpu_custom_call.1} parent=11 // pred_check
          %p391 = pneg %p246
        $region42: #{tpu_custom_call.1} parent=11 // pred_check_branch
          %393 = sbr.rel (%p391) target = $region44
        $region43: #{tpu_custom_call.1} parent=11 // pred_region
          _
        $region44: #{tpu_custom_call.1} parent=11 // pred_fallthru
          _
        // Predicated region
        $region45: #{tpu_custom_call.1} parent=11 // pred_check
          %p394 = pneg %p267
        $region46: #{tpu_custom_call.1} parent=11 // pred_check_branch
          %396 = sbr.rel (%p394) target = $region48
        $region47: #{tpu_custom_call.1} parent=11 // pred_region
          %s398 = ssub.s32 2048, 2048
          %399 = vsyncadd [#allocation8], %s398
          %s400 = sshll.u32 [#allocation9], 4
          %s401 = int_to_ptr.vmem [resolvable:$true] %s400
          %406 = dma.hbm_to_vmem [thread:$0]  %s10, 2048, %s401, [#allocation8], 128, 128, 8
        $region48: #{tpu_custom_call.1} parent=11 // pred_fallthru
          _
        // Predicated region
        $region49: #{tpu_custom_call.1} parent=11 // pred_check
          %p407 = pneg %p288
        $region50: #{tpu_custom_call.1} parent=11 // pred_check_branch
          %409 = sbr.rel (%p407) target = $region52
        $region51: #{tpu_custom_call.1} parent=11 // pred_region
          _
        $region52: #{tpu_custom_call.1} parent=11 // pred_fallthru
          _
      $region12: #{tpu_custom_call.1} parent=5 // pred_fallthru
        _
      %p410 = scmp.lt.s32.totalorder %s26, 2
      // Predicated region
      $region53: #{tpu_custom_call.1} parent=5 // pred_check
        %p411 = pneg %p410
      $region54: #{tpu_custom_call.1} parent=5 // pred_check_branch
        %413 = sbr.rel (%p411) target = $region56
      $region55: #{tpu_custom_call.1} parent=5 // pred_region
        // Predicated region
        $region57: #{tpu_custom_call.1} parent=55 // pred_check
          %p414 = pneg %p46
        $region58: #{tpu_custom_call.1} parent=55 // pred_check_branch
          %416 = sbr.rel (%p414) target = $region60
        $region59: #{tpu_custom_call.1} parent=55 // pred_region
          %s417 = smul.u32 4, %s26
          %p418 = scmp.lt.s32.totalorder %s417, 7
          %s419 = scalar_select %p418, %s417, 7
          %s420 = smul.addr %s419, 8
          %s421 = scalar_lea.vmem %s0, %s420
          %s422 = smul.u32 4, %s26
        $region60: #{tpu_custom_call.1} parent=55 // pred_fallthru
          _
        // Predicated region
        $region61: #{tpu_custom_call.1} parent=55 // pred_check
          %p423 = pneg %p72
        $region62: #{tpu_custom_call.1} parent=55 // pred_check_branch
          %425 = sbr.rel (%p423) target = $region64
        $region63: #{tpu_custom_call.1} parent=55 // pred_region
          %p426 = scmp.lt.s32.totalorder %s26, 1
          %s427 = scalar_select %p426, %s26, 1
          %s428 = smul.addr %s427, 8
          %s429 = scalar_lea.vmem %s1, %s428
        $region64: #{tpu_custom_call.1} parent=55 // pred_fallthru
          _
      $region56: #{tpu_custom_call.1} parent=5 // pred_fallthru
        _
      %p430 = scmp.le.s32.totalorder 1, %s26
      %p431 = scmp.lt.s32.totalorder %s26, 3
      %p432 = pnand %p430, %p431
      %p433 = pneg %p432
      // Predicated region
      $region65: #{tpu_custom_call.1} parent=5 // pred_check
        _
      $region66: #{tpu_custom_call.1} parent=5 // pred_check_branch
        %435 = sbr.rel (%p432) target = $region68
      $region67: #{tpu_custom_call.1} parent=5 // pred_region
        %s436 = ssub.s32 %s26, 1
        // Predicated region
        $region69: #{tpu_custom_call.1} parent=67 // pred_check
          %p437 = pneg %p183
        $region70: #{tpu_custom_call.1} parent=67 // pred_check_branch
          %439 = sbr.rel (%p437) target = $region72
        $region71: #{tpu_custom_call.1} parent=67 // pred_region
          %440 = dma.done [#allocation5], 2048
        $region72: #{tpu_custom_call.1} parent=67 // pred_fallthru
          _
        // Predicated region
        $region73: #{tpu_custom_call.1} parent=67 // pred_check
          %p441 = pneg %p225
        $region74: #{tpu_custom_call.1} parent=67 // pred_check_branch
          %443 = sbr.rel (%p441) target = $region76
        $region75: #{tpu_custom_call.1} parent=67 // pred_region
          %444 = dma.done [#allocation8], 2048
        $region76: #{tpu_custom_call.1} parent=67 // pred_fallthru
          _
        // Predicated region
        $region77: #{tpu_custom_call.1} parent=67 // pred_check
          %p445 = pneg %p267
        $region78: #{tpu_custom_call.1} parent=67 // pred_check_branch
          %447 = sbr.rel (%p445) target = $region80
        $region79: #{tpu_custom_call.1} parent=67 // pred_region
          %448 = dma.done [#allocation8], 2048
        $region80: #{tpu_custom_call.1} parent=67 // pred_fallthru
          _
        %s449 = smul.u32 4, %s31
        %p450 = scmp.lt.s32.totalorder %s449, 7
        %s451 = scalar_select %p450, %s449, 7
        %s452 = smul.addr %s451, 8
        %s453 = scalar_lea.vmem %s0, %s452
        %p454 = pneg %p52
        %p455 = pneg %p49
        %p456 = scmp.lt.s32.totalorder %s31, 1
        %s457 = scalar_select %p456, %s31, 1
        %s458 = smul.addr %s457, 8
        %s459 = scalar_lea.vmem %s1, %s458
        %p460 = pneg %p78
        %p461 = pneg %p75
        %p462 = pneg %p99
        %p463 = pneg %p96
        %p464 = pneg %p120
        %p465 = pneg %p117
        %p466 = pneg %p141
        %p467 = pneg %p138
        %p468 = pneg %p162
        %p469 = pneg %p159
        %p470 = pneg %p183
        %p471 = pneg %p180
        %p472 = pneg %p204
        %p473 = pneg %p201
        %p474 = pneg %p225
        %p475 = pneg %p222
        %p476 = pneg %p246
        %p477 = pneg %p243
        %p478 = pneg %p267
        %p479 = pneg %p264
        %p480 = pneg %p288
        %p481 = pneg %p285
        %p482 = pneg %p314
        %p483 = pneg %p311
        %s484 = sand.u32 %s301, 1
        %s485 = scalar_lea.sflag [#allocation6], %s484
        %s486 = sand.u32 %s301, 1
        %s487 = smul.addr %s486, 32
        %s488 = scalar_lea.vmem [#allocation10], %s487
        %p489 = pneg %p335
        %p490 = pneg %p332
        %s491 = smul.u32 4, %s31
        %p492 = scmp.lt.s32.totalorder %s491, 7
        %s493 = scalar_select %p492, %s491, 7
        %s494 = smul.addr %s493, 8
        %s495 = scalar_lea.vmem %s0, %s494
        %s496 = smul.u32 4, %s31
        %p497 = scmp.lt.s32.totalorder %s31, 1
        %s498 = scalar_select %p497, %s31, 1
        %s499 = smul.addr %s498, 8
        %s500 = scalar_lea.vmem %s1, %s499
        %s501 = smul.u32 4, %s31
        %p502 = scmp.eq.s32.totalorder %s31, 0
        // Predicated region
        $region81: #{tpu_custom_call.1} parent=67 // pred_check
          %p503 = pneg %p502
        $region82: #{tpu_custom_call.1} parent=67 // pred_check_branch
          %505 = sbr.rel (%p503) target = $region84
        $region83: #{tpu_custom_call.1} parent=67 // pred_region
          %506 = vst [vmem:[#allocation2] sm:$0xff] 0.0
          %507 = vst [vmem:[#allocation3] sm:$0xff] 0.0
        $region84: #{tpu_custom_call.1} parent=67 // pred_fallthru
          _
        %v508 = vld [vmem:[#allocation4] sm:$0xff]
        %v509 = vld [vmem:[#allocation4 + $0x8] sm:$0xff]
        %v510 = vld [vmem:[#allocation4 + $0x10] sm:$0xff]
        %v511 = vld [vmem:[#allocation4 + $0x18] sm:$0xff]
        %v512 = vld [vmem:[#allocation4 + $0x20] sm:$0xff]
        %v513 = vld [vmem:[#allocation4 + $0x28] sm:$0xff]
        %v514 = vld [vmem:[#allocation4 + $0x30] sm:$0xff]
        %v515 = vld [vmem:[#allocation4 + $0x38] sm:$0xff]
        %v516 = vld [vmem:[#allocation4 + $0x40] sm:$0xff]
        %v517 = vld [vmem:[#allocation4 + $0x48] sm:$0xff]
        %v518 = vld [vmem:[#allocation4 + $0x50] sm:$0xff]
        %v519 = vld [vmem:[#allocation4 + $0x58] sm:$0xff]
        %v520 = vld [vmem:[#allocation4 + $0x60] sm:$0xff]
        %v521 = vld [vmem:[#allocation4 + $0x68] sm:$0xff]
        %v522 = vld [vmem:[#allocation4 + $0x70] sm:$0xff]
        %v523 = vld [vmem:[#allocation4 + $0x78] sm:$0xff]
        %v524 = vld [vmem:[%s495] sm:$0xff]
        %v525 = vld [vmem:[%s495 + $0x8] sm:$0xff]
        %v526 = vld [vmem:[%s495 + $0x10] sm:$0xff]
        %v527 = vld [vmem:[%s495 + $0x18] sm:$0xff]
        %v528 = vld [vmem:[%s5] sm:$0x3f]
        %v529 = vld [vmem:[%s7] sm:$0x1]
        %v531 = vlaneseq
        %v532 = vshrl.u32 %v531, 7
        %v533 = vsub.s32 0, %v532
        %v534 = vrot.slane %v529, %v533
        %vm536 = vcmask 48128
        %v538 = vsel %vm536, %v524, 0
        %v541 = vsel %vm536, %v525, 0
        %v544 = vsel %vm536, %v526, 0
        %v547 = vsel %vm536, %v527, 0
        %vm549 = vcmask 1045504
        %v551 = vsel %vm549, %v528, 0
        %553 = vmatprep.subr.mxu0 0.0
        %554 = vmatpush1.msra.mxu0 %v551
        %555 = vmatprep.subr.mxu0 0.0
        %556 = vmatpush1.msra.mxu0 0.0
        %557 = vmatprep.subr.mxu0 0.0
        %558 = vmatpush1.msra.mxu0 0.0
        %559 = vmatprep.subr.mxu0 0.0
        %560 = vmatpush1.msra.mxu0 0.0
        %561 = vmatprep.subr.mxu0 0.0
        %562 = vmatpush1.msra.mxu0 0.0
        %563 = vmatprep.subr.mxu0 0.0
        %564 = vmatpush1.msra.mxu0 0.0
        %565 = vmatprep.subr.mxu0 0.0
        %566 = vmatpush1.msra.mxu0 0.0
        %567 = vmatprep.subr.mxu0 0.0
        %568 = vmatpush1.msra.mxu0 0.0
        %569 = vmatprep.subr.mxu0 0.0
        %570 = vmatpush1.msra.mxu0 0.0
        %571 = vmatprep.subr.mxu0 0.0
        %572 = vmatpush1.msra.mxu0 0.0
        %573 = vmatprep.subr.mxu0 0.0
        %574 = vmatpush1.msra.mxu0 0.0
        %575 = vmatprep.subr.mxu0 0.0
        %576 = vmatpush1.msra.mxu0 0.0
        %577 = vmatprep.subr.mxu0 0.0
        %578 = vmatpush1.msra.mxu0 0.0
        %579 = vmatprep.subr.mxu0 0.0
        %580 = vmatpush1.msra.mxu0 0.0
        %581 = vmatprep.subr.mxu0 0.0
        %582 = vmatpush1.msra.mxu0 0.0
        %583 = vmatprep.subr.mxu0 0.0
        %584 = vmatpush1.msra.mxu0 0.0
        %585 = vmatprep.subr.mxu0 0.0
        %586 = vmatpush1.msra.mxu0 0.0
        %587 = vmatprep.subr.mxu0 0.0
        %588 = vmatpush1.msra.mxu0 0.0
        %589 = vmatprep.subr.mxu0 0.0
        %590 = vmatpush1.msra.mxu0 0.0
        %591 = vmatprep.subr.mxu0 0.0
        %592 = vmatpush1.msra.mxu0 0.0
        %593 = vmatprep.subr.mxu0 0.0
        %594 = vmatpush1.msra.mxu0 0.0
        %595 = vmatprep.subr.mxu0 0.0
        %596 = vmatpush1.msra.mxu0 0.0
        %597 = vmatprep.subr.mxu0 0.0
        %598 = vmatpush1.msra.mxu0 0.0
        %599 = vmatprep.subr.mxu0 0.0
        %600 = vmatpush1.msra.mxu0 0.0
        %601 = vmatprep.subr.mxu0 0.0
        %602 = vmatpush1.msra.mxu0 0.0
        %603 = vmatprep.subr.mxu0 0.0
        %604 = vmatpush1.msra.mxu0 0.0
        %605 = vmatprep.subr.mxu0 0.0
        %606 = vmatpush1.msra.mxu0 0.0
        %607 = vmatprep.subr.mxu0 0.0
        %608 = vmatpush1.msra.mxu0 0.0
        %609 = vmatprep.subr.mxu0 0.0
        %610 = vmatpush1.msra.mxu0 0.0
        %611 = vmatprep.subr.mxu0 0.0
        %612 = vmatpush1.msra.mxu0 0.0
        %613 = vmatprep.subr.mxu0 0.0
        %614 = vmatpush1.msra.mxu0 0.0
        %615 = vmatprep.subr.mxu0 0.0
        %616 = vmatpush1.msra.mxu0 0.0
        %617 = vmatprep.mubr.f32.mxu0 0.0
        %618 = vmatmul.mubr.f32.gmra.mrb[0].mxu0 %v538
        %v619 = vpop.f32.mrb[0].mxu0
        %v620 = vadd.f32 %v534, %v619
        %v621 = vpop.f32.mrb[0].mxu0
        %622 = vmatprep.mubr.f32.mxu0 0.0
        %623 = vmatmul.mubr.f32.gmra.mrb[0].mxu0 %v541
        %v624 = vpop.f32.mrb[0].mxu0
        %v625 = vadd.f32 %v534, %v624
        %v626 = vpop.f32.mrb[0].mxu0
        %627 = vmatprep.mubr.f32.mxu0 0.0
        %628 = vmatmul.mubr.f32.gmra.mrb[0].mxu0 %v544
        %v629 = vpop.f32.mrb[0].mxu0
        %v630 = vadd.f32 %v534, %v629
        %v631 = vpop.f32.mrb[0].mxu0
        %632 = vmatprep.mubr.f32.mxu0 0.0
        %633 = vmatmul.mubr.f32.gmra.mrb[0].mxu0 %v547
        %v634 = vpop.f32.mrb[0].mxu0
        %v635 = vadd.f32 %v534, %v634
        %v636 = vpop.f32.mrb[0].mxu0
        %637 = vdwg.mxu0
        %v638 = vld [vmem:[#allocation2] sm:$0xff]
        %639 = vmatprep.subr.mxu0 0.0
        %640 = vmatpush1.msra.mxu0 %v508
        %641 = vmatprep.subr.mxu0 0.0
        %642 = vmatpush1.msra.mxu0 %v509
        %643 = vmatprep.subr.mxu0 0.0
        %644 = vmatpush1.msra.mxu0 %v510
        %645 = vmatprep.subr.mxu0 0.0
        %646 = vmatpush1.msra.mxu0 %v511
        %647 = vmatprep.subr.mxu0 0.0
        %648 = vmatpush1.msra.mxu0 %v512
        %649 = vmatprep.subr.mxu0 0.0
        %650 = vmatpush1.msra.mxu0 %v513
        %651 = vmatprep.subr.mxu0 0.0
        %652 = vmatpush1.msra.mxu0 %v514
        %653 = vmatprep.subr.mxu0 0.0
        %654 = vmatpush1.msra.mxu0 %v515
        %655 = vmatprep.subr.mxu0 0.0
        %656 = vmatpush1.msra.mxu0 %v516
        %657 = vmatprep.subr.mxu0 0.0
        %658 = vmatpush1.msra.mxu0 %v517
        %659 = vmatprep.subr.mxu0 0.0
        %660 = vmatpush1.msra.mxu0 %v518
        %661 = vmatprep.subr.mxu0 0.0
        %662 = vmatpush1.msra.mxu0 %v519
        %663 = vmatprep.subr.mxu0 0.0
        %664 = vmatpush1.msra.mxu0 %v520
        %665 = vmatprep.subr.mxu0 0.0
        %666 = vmatpush1.msra.mxu0 %v521
        %667 = vmatprep.subr.mxu0 0.0
        %668 = vmatpush1.msra.mxu0 %v522
        %669 = vmatprep.subr.mxu0 0.0
        %670 = vmatpush1.msra.mxu0 %v523
        %671 = vmatprep.subr.mxu0 0.0
        %672 = vmatpush1.msra.mxu0 0.0
        %673 = vmatprep.subr.mxu0 0.0
        %674 = vmatpush1.msra.mxu0 0.0
        %675 = vmatprep.subr.mxu0 0.0
        %676 = vmatpush1.msra.mxu0 0.0
        %677 = vmatprep.subr.mxu0 0.0
        %678 = vmatpush1.msra.mxu0 0.0
        %679 = vmatprep.subr.mxu0 0.0
        %680 = vmatpush1.msra.mxu0 0.0
        %681 = vmatprep.subr.mxu0 0.0
        %682 = vmatpush1.msra.mxu0 0.0
        %683 = vmatprep.subr.mxu0 0.0
        %684 = vmatpush1.msra.mxu0 0.0
        %685 = vmatprep.subr.mxu0 0.0
        %686 = vmatpush1.msra.mxu0 0.0
        %687 = vmatprep.subr.mxu0 0.0
        %688 = vmatpush1.msra.mxu0 0.0
        %689 = vmatprep.subr.mxu0 0.0
        %690 = vmatpush1.msra.mxu0 0.0
        %691 = vmatprep.subr.mxu0 0.0
        %692 = vmatpush1.msra.mxu0 0.0
        %693 = vmatprep.subr.mxu0 0.0
        %694 = vmatpush1.msra.mxu0 0.0
        %695 = vmatprep.subr.mxu0 0.0
        %696 = vmatpush1.msra.mxu0 0.0
        %697 = vmatprep.subr.mxu0 0.0
        %698 = vmatpush1.msra.mxu0 0.0
        %699 = vmatprep.subr.mxu0 0.0
        %700 = vmatpush1.msra.mxu0 0.0
        %701 = vmatprep.subr.mxu0 0.0
        %702 = vmatpush1.msra.mxu0 0.0
        %703 = vmatprep.mubr.f32.mxu0 0.0
        %704 = vmatmul.mubr.f32.gmra.mrb[0].mxu0 %v638
        %v705 = vpop.f32.mrb[0].mxu0
        %v706 = vadd.f32 0.0, %v705
        %v707 = vpop.f32.mrb[0].mxu0
        %708 = vdwg.mxu0
        %v709 = vadd.f32 %v620, %v706
        %v710 = vtanh.pop %v709
        %711 = vmatprep.subr.mxu0 0.0
        %712 = vmatpush1.msra.mxu0 %v508
        %713 = vmatprep.subr.mxu0 0.0
        %714 = vmatpush1.msra.mxu0 %v509
        %715 = vmatprep.subr.mxu0 0.0
        %716 = vmatpush1.msra.mxu0 %v510
        %717 = vmatprep.subr.mxu0 0.0
        %718 = vmatpush1.msra.mxu0 %v511
        %719 = vmatprep.subr.mxu0 0.0
        %720 = vmatpush1.msra.mxu0 %v512
        %721 = vmatprep.subr.mxu0 0.0
        %722 = vmatpush1.msra.mxu0 %v513
        %723 = vmatprep.subr.mxu0 0.0
        %724 = vmatpush1.msra.mxu0 %v514
        %725 = vmatprep.subr.mxu0 0.0
        %726 = vmatpush1.msra.mxu0 %v515
        %727 = vmatprep.subr.mxu0 0.0
        %728 = vmatpush1.msra.mxu0 %v516
        %729 = vmatprep.subr.mxu0 0.0
        %730 = vmatpush1.msra.mxu0 %v517
        %731 = vmatprep.subr.mxu0 0.0
        %732 = vmatpush1.msra.mxu0 %v518
        %733 = vmatprep.subr.mxu0 0.0
        %734 = vmatpush1.msra.mxu0 %v519
        %735 = vmatprep.subr.mxu0 0.0
        %736 = vmatpush1.msra.mxu0 %v520
        %737 = vmatprep.subr.mxu0 0.0
        %738 = vmatpush1.msra.mxu0 %v521
        %739 = vmatprep.subr.mxu0 0.0
        %740 = vmatpush1.msra.mxu0 %v522
        %741 = vmatprep.subr.mxu0 0.0
        %742 = vmatpush1.msra.mxu0 %v523
        %743 = vmatprep.subr.mxu0 0.0
        %744 = vmatpush1.msra.mxu0 0.0
        %745 = vmatprep.subr.mxu0 0.0
        %746 = vmatpush1.msra.mxu0 0.0
        %747 = vmatprep.subr.mxu0 0.0
        %748 = vmatpush1.msra.mxu0 0.0
        %749 = vmatprep.subr.mxu0 0.0
        %750 = vmatpush1.msra.mxu0 0.0
        %751 = vmatprep.subr.mxu0 0.0
        %752 = vmatpush1.msra.mxu0 0.0
        %753 = vmatprep.subr.mxu0 0.0
        %754 = vmatpush1.msra.mxu0 0.0
        %755 = vmatprep.subr.mxu0 0.0
        %756 = vmatpush1.msra.mxu0 0.0
        %757 = vmatprep.subr.mxu0 0.0
        %758 = vmatpush1.msra.mxu0 0.0
        %759 = vmatprep.subr.mxu0 0.0
        %760 = vmatpush1.msra.mxu0 0.0
        %761 = vmatprep.subr.mxu0 0.0
        %762 = vmatpush1.msra.mxu0 0.0
        %763 = vmatprep.subr.mxu0 0.0
        %764 = vmatpush1.msra.mxu0 0.0
        %765 = vmatprep.subr.mxu0 0.0
        %766 = vmatpush1.msra.mxu0 0.0
        %767 = vmatprep.subr.mxu0 0.0
        %768 = vmatpush1.msra.mxu0 0.0
        %769 = vmatprep.subr.mxu0 0.0
        %770 = vmatpush1.msra.mxu0 0.0
        %771 = vmatprep.subr.mxu0 0.0
        %772 = vmatpush1.msra.mxu0 0.0
        %773 = vmatprep.subr.mxu0 0.0
        %774 = vmatpush1.msra.mxu0 0.0
        %775 = vmatprep.mubr.f32.mxu0 0.0
        %776 = vmatmul.mubr.f32.gmra.mrb[0].mxu0 %v710
        %v777 = vpop.f32.mrb[0].mxu0
        %v778 = vadd.f32 0.0, %v777
        %v779 = vpop.f32.mrb[0].mxu0
        %780 = vdwg.mxu0
        %v781 = vadd.f32 %v625, %v778
        %v782 = vtanh.pop %v781
        %783 = vmatprep.subr.mxu0 0.0
        %784 = vmatpush1.msra.mxu0 %v508
        %785 = vmatprep.subr.mxu0 0.0
        %786 = vmatpush1.msra.mxu0 %v509
        %787 = vmatprep.subr.mxu0 0.0
        %788 = vmatpush1.msra.mxu0 %v510
        %789 = vmatprep.subr.mxu0 0.0
        %790 = vmatpush1.msra.mxu0 %v511
        %791 = vmatprep.subr.mxu0 0.0
        %792 = vmatpush1.msra.mxu0 %v512
        %793 = vmatprep.subr.mxu0 0.0
        %794 = vmatpush1.msra.mxu0 %v513
        %795 = vmatprep.subr.mxu0 0.0
        %796 = vmatpush1.msra.mxu0 %v514
        %797 = vmatprep.subr.mxu0 0.0
        %798 = vmatpush1.msra.mxu0 %v515
        %799 = vmatprep.subr.mxu0 0.0
        %800 = vmatpush1.msra.mxu0 %v516
        %801 = vmatprep.subr.mxu0 0.0
        %802 = vmatpush1.msra.mxu0 %v517
        %803 = vmatprep.subr.mxu0 0.0
        %804 = vmatpush1.msra.mxu0 %v518
        %805 = vmatprep.subr.mxu0 0.0
        %806 = vmatpush1.msra.mxu0 %v519
        %807 = vmatprep.subr.mxu0 0.0
        %808 = vmatpush1.msra.mxu0 %v520
        %809 = vmatprep.subr.mxu0 0.0
        %810 = vmatpush1.msra.mxu0 %v521
        %811 = vmatprep.subr.mxu0 0.0
        %812 = vmatpush1.msra.mxu0 %v522
        %813 = vmatprep.subr.mxu0 0.0
        %814 = vmatpush1.msra.mxu0 %v523
        %815 = vmatprep.subr.mxu0 0.0
        %816 = vmatpush1.msra.mxu0 0.0
        %817 = vmatprep.subr.mxu0 0.0
        %818 = vmatpush1.msra.mxu0 0.0
        %819 = vmatprep.subr.mxu0 0.0
        %820 = vmatpush1.msra.mxu0 0.0
        %821 = vmatprep.subr.mxu0 0.0
        %822 = vmatpush1.msra.mxu0 0.0
        %823 = vmatprep.subr.mxu0 0.0
        %824 = vmatpush1.msra.mxu0 0.0
        %825 = vmatprep.subr.mxu0 0.0
        %826 = vmatpush1.msra.mxu0 0.0
        %827 = vmatprep.subr.mxu0 0.0
        %828 = vmatpush1.msra.mxu0 0.0
        %829 = vmatprep.subr.mxu0 0.0
        %830 = vmatpush1.msra.mxu0 0.0
        %831 = vmatprep.subr.mxu0 0.0
        %832 = vmatpush1.msra.mxu0 0.0
        %833 = vmatprep.subr.mxu0 0.0
        %834 = vmatpush1.msra.mxu0 0.0
        %835 = vmatprep.subr.mxu0 0.0
        %836 = vmatpush1.msra.mxu0 0.0
        %837 = vmatprep.subr.mxu0 0.0
        %838 = vmatpush1.msra.mxu0 0.0
        %839 = vmatprep.subr.mxu0 0.0
        %840 = vmatpush1.msra.mxu0 0.0
        %841 = vmatprep.subr.mxu0 0.0
        %842 = vmatpush1.msra.mxu0 0.0
        %843 = vmatprep.subr.mxu0 0.0
        %844 = vmatpush1.msra.mxu0 0.0
        %845 = vmatprep.subr.mxu0 0.0
        %846 = vmatpush1.msra.mxu0 0.0
        %847 = vmatprep.mubr.f32.mxu0 0.0
        %848 = vmatmul.mubr.f32.gmra.mrb[0].mxu0 %v782
        %v849 = vpop.f32.mrb[0].mxu0
        %v850 = vadd.f32 0.0, %v849
        %v851 = vpop.f32.mrb[0].mxu0
        %852 = vdwg.mxu0
        %v853 = vadd.f32 %v630, %v850
        %v854 = vtanh.pop %v853
        %855 = vmatprep.subr.mxu0 0.0
        %856 = vmatpush1.msra.mxu0 %v508
        %857 = vmatprep.subr.mxu0 0.0
        %858 = vmatpush1.msra.mxu0 %v509
        %859 = vmatprep.subr.mxu0 0.0
        %860 = vmatpush1.msra.mxu0 %v510
        %861 = vmatprep.subr.mxu0 0.0
        %862 = vmatpush1.msra.mxu0 %v511
        %863 = vmatprep.subr.mxu0 0.0
        %864 = vmatpush1.msra.mxu0 %v512
        %865 = vmatprep.subr.mxu0 0.0
        %866 = vmatpush1.msra.mxu0 %v513
        %867 = vmatprep.subr.mxu0 0.0
        %868 = vmatpush1.msra.mxu0 %v514
        %869 = vmatprep.subr.mxu0 0.0
        %870 = vmatpush1.msra.mxu0 %v515
        %871 = vmatprep.subr.mxu0 0.0
        %872 = vmatpush1.msra.mxu0 %v516
        %873 = vmatprep.subr.mxu0 0.0
        %874 = vmatpush1.msra.mxu0 %v517
        %875 = vmatprep.subr.mxu0 0.0
        %876 = vmatpush1.msra.mxu0 %v518
        %877 = vmatprep.subr.mxu0 0.0
        %878 = vmatpush1.msra.mxu0 %v519
        %879 = vmatprep.subr.mxu0 0.0
        %880 = vmatpush1.msra.mxu0 %v520
        %881 = vmatprep.subr.mxu0 0.0
        %882 = vmatpush1.msra.mxu0 %v521
        %883 = vmatprep.subr.mxu0 0.0
        %884 = vmatpush1.msra.mxu0 %v522
        %885 = vmatprep.subr.mxu0 0.0
        %886 = vmatpush1.msra.mxu0 %v523
        %887 = vmatprep.subr.mxu0 0.0
        %888 = vmatpush1.msra.mxu0 0.0
        %889 = vmatprep.subr.mxu0 0.0
        %890 = vmatpush1.msra.mxu0 0.0
        %891 = vmatprep.subr.mxu0 0.0
        %892 = vmatpush1.msra.mxu0 0.0
        %893 = vmatprep.subr.mxu0 0.0
        %894 = vmatpush1.msra.mxu0 0.0
        %895 = vmatprep.subr.mxu0 0.0
        %896 = vmatpush1.msra.mxu0 0.0
        %897 = vmatprep.subr.mxu0 0.0
        %898 = vmatpush1.msra.mxu0 0.0
        %899 = vmatprep.subr.mxu0 0.0
        %900 = vmatpush1.msra.mxu0 0.0
        %901 = vmatprep.subr.mxu0 0.0
        %902 = vmatpush1.msra.mxu0 0.0
        %903 = vmatprep.subr.mxu0 0.0
        %904 = vmatpush1.msra.mxu0 0.0
        %905 = vmatprep.subr.mxu0 0.0
        %906 = vmatpush1.msra.mxu0 0.0
        %907 = vmatprep.subr.mxu0 0.0
        %908 = vmatpush1.msra.mxu0 0.0
        %909 = vmatprep.subr.mxu0 0.0
        %910 = vmatpush1.msra.mxu0 0.0
        %911 = vmatprep.subr.mxu0 0.0
        %912 = vmatpush1.msra.mxu0 0.0
        %913 = vmatprep.subr.mxu0 0.0
        %914 = vmatpush1.msra.mxu0 0.0
        %915 = vmatprep.subr.mxu0 0.0
        %916 = vmatpush1.msra.mxu0 0.0
        %917 = vmatprep.subr.mxu0 0.0
        %918 = vmatpush1.msra.mxu0 0.0
        %919 = vmatprep.mubr.f32.mxu0 0.0
        %920 = vmatmul.mubr.f32.gmra.mrb[0].mxu0 %v854
        %v921 = vpop.f32.mrb[0].mxu0
        %v922 = vadd.f32 0.0, %v921
        %v923 = vpop.f32.mrb[0].mxu0
        %924 = vdwg.mxu0
        %v925 = vadd.f32 %v635, %v922
        %v926 = vtanh.pop %v925
        %927 = vst [vmem:[#allocation2] sm:$0xff] %v926
        %v928 = vmax.f32 %v710, 0.0
        %v929 = vmax.f32 %v782, 0.0
        %v930 = vmax.f32 %v854, 0.0
        %v931 = vmax.f32 %v926, 0.0
        %v932 = vld [vmem:[#allocation7] sm:$0xff]
        %v933 = vld [vmem:[#allocation7 + $0x8] sm:$0xff]
        %v934 = vld [vmem:[#allocation7 + $0x10] sm:$0xff]
        %v935 = vld [vmem:[#allocation7 + $0x18] sm:$0xff]
        %v936 = vld [vmem:[#allocation7 + $0x20] sm:$0xff]
        %v937 = vld [vmem:[#allocation7 + $0x28] sm:$0xff]
        %v938 = vld [vmem:[#allocation7 + $0x30] sm:$0xff]
        %v939 = vld [vmem:[#allocation7 + $0x38] sm:$0xff]
        %v940 = vld [vmem:[#allocation7 + $0x40] sm:$0xff]
        %v941 = vld [vmem:[#allocation7 + $0x48] sm:$0xff]
        %v942 = vld [vmem:[#allocation7 + $0x50] sm:$0xff]
        %v943 = vld [vmem:[#allocation7 + $0x58] sm:$0xff]
        %v944 = vld [vmem:[#allocation7 + $0x60] sm:$0xff]
        %v945 = vld [vmem:[#allocation7 + $0x68] sm:$0xff]
        %v946 = vld [vmem:[#allocation7 + $0x70] sm:$0xff]
        %v947 = vld [vmem:[#allocation7 + $0x78] sm:$0xff]
        %v948 = vld [vmem:[%s9] sm:$0x1]
        %v950 = vlaneseq
        %v951 = vshrl.u32 %v950, 7
        %v952 = vsub.s32 0, %v951
        %v953 = vrot.slane %v948, %v952
        %955 = vmatprep.subr.mxu0 0.0
        %956 = vmatpush1.msra.mxu0 %v932
        %957 = vmatprep.subr.mxu0 0.0
        %958 = vmatpush1.msra.mxu0 %v933
        %959 = vmatprep.subr.mxu0 0.0
        %960 = vmatpush1.msra.mxu0 %v934
        %961 = vmatprep.subr.mxu0 0.0
        %962 = vmatpush1.msra.mxu0 %v935
        %963 = vmatprep.subr.mxu0 0.0
        %964 = vmatpush1.msra.mxu0 %v936
        %965 = vmatprep.subr.mxu0 0.0
        %966 = vmatpush1.msra.mxu0 %v937
        %967 = vmatprep.subr.mxu0 0.0
        %968 = vmatpush1.msra.mxu0 %v938
        %969 = vmatprep.subr.mxu0 0.0
        %970 = vmatpush1.msra.mxu0 %v939
        %971 = vmatprep.subr.mxu0 0.0
        %972 = vmatpush1.msra.mxu0 %v940
        %973 = vmatprep.subr.mxu0 0.0
        %974 = vmatpush1.msra.mxu0 %v941
        %975 = vmatprep.subr.mxu0 0.0
        %976 = vmatpush1.msra.mxu0 %v942
        %977 = vmatprep.subr.mxu0 0.0
        %978 = vmatpush1.msra.mxu0 %v943
        %979 = vmatprep.subr.mxu0 0.0
        %980 = vmatpush1.msra.mxu0 %v944
        %981 = vmatprep.subr.mxu0 0.0
        %982 = vmatpush1.msra.mxu0 %v945
        %983 = vmatprep.subr.mxu0 0.0
        %984 = vmatpush1.msra.mxu0 %v946
        %985 = vmatprep.subr.mxu0 0.0
        %986 = vmatpush1.msra.mxu0 %v947
        %987 = vmatprep.subr.mxu0 0.0
        %988 = vmatpush1.msra.mxu0 0.0
        %989 = vmatprep.subr.mxu0 0.0
        %990 = vmatpush1.msra.mxu0 0.0
        %991 = vmatprep.subr.mxu0 0.0
        %992 = vmatpush1.msra.mxu0 0.0
        %993 = vmatprep.subr.mxu0 0.0
        %994 = vmatpush1.msra.mxu0 0.0
        %995 = vmatprep.subr.mxu0 0.0
        %996 = vmatpush1.msra.mxu0 0.0
        %997 = vmatprep.subr.mxu0 0.0
        %998 = vmatpush1.msra.mxu0 0.0
        %999 = vmatprep.subr.mxu0 0.0
        %1000 = vmatpush1.msra.mxu0 0.0
        %1001 = vmatprep.subr.mxu0 0.0
        %1002 = vmatpush1.msra.mxu0 0.0
        %1003 = vmatprep.subr.mxu0 0.0
        %1004 = vmatpush1.msra.mxu0 0.0
        %1005 = vmatprep.subr.mxu0 0.0
        %1006 = vmatpush1.msra.mxu0 0.0
        %1007 = vmatprep.subr.mxu0 0.0
        %1008 = vmatpush1.msra.mxu0 0.0
        %1009 = vmatprep.subr.mxu0 0.0
        %1010 = vmatpush1.msra.mxu0 0.0
        %1011 = vmatprep.subr.mxu0 0.0
        %1012 = vmatpush1.msra.mxu0 0.0
        %1013 = vmatprep.subr.mxu0 0.0
        %1014 = vmatpush1.msra.mxu0 0.0
        %1015 = vmatprep.subr.mxu0 0.0
        %1016 = vmatpush1.msra.mxu0 0.0
        %1017 = vmatprep.subr.mxu0 0.0
        %1018 = vmatpush1.msra.mxu0 0.0
        %1019 = vmatprep.mubr.f32.mxu0 0.0
        %1020 = vmatmul.mubr.f32.gmra.mrb[0].mxu0 %v928
        %v1021 = vpop.f32.mrb[0].mxu0
        %v1022 = vadd.f32 %v953, %v1021
        %v1023 = vpop.f32.mrb[0].mxu0
        %1024 = vmatprep.mubr.f32.mxu0 0.0
        %1025 = vmatmul.mubr.f32.gmra.mrb[0].mxu0 %v929
        %v1026 = vpop.f32.mrb[0].mxu0
        %v1027 = vadd.f32 %v953, %v1026
        %v1028 = vpop.f32.mrb[0].mxu0
        %1029 = vmatprep.mubr.f32.mxu0 0.0
        %1030 = vmatmul.mubr.f32.gmra.mrb[0].mxu0 %v930
        %v1031 = vpop.f32.mrb[0].mxu0
        %v1032 = vadd.f32 %v953, %v1031
        %v1033 = vpop.f32.mrb[0].mxu0
        %1034 = vmatprep.mubr.f32.mxu0 0.0
        %1035 = vmatmul.mubr.f32.gmra.mrb[0].mxu0 %v931
        %v1036 = vpop.f32.mrb[0].mxu0
        %v1037 = vadd.f32 %v953, %v1036
        %v1038 = vpop.f32.mrb[0].mxu0
        %1039 = vdwg.mxu0
        %v1040 = vmax.f32 %v1022, 0.0
        %v1041 = vmax.f32 %v1027, 0.0
        %v1042 = vmax.f32 %v1032, 0.0
        %v1043 = vmax.f32 %v1037, 0.0
        %v1044 = vld [vmem:[#allocation9] sm:$0xff]
        %v1045 = vld [vmem:[#allocation9 + $0x8] sm:$0xff]
        %v1046 = vld [vmem:[#allocation9 + $0x10] sm:$0xff]
        %v1047 = vld [vmem:[#allocation9 + $0x18] sm:$0xff]
        %v1048 = vld [vmem:[#allocation9 + $0x20] sm:$0xff]
        %v1049 = vld [vmem:[#allocation9 + $0x28] sm:$0xff]
        %v1050 = vld [vmem:[#allocation9 + $0x30] sm:$0xff]
        %v1051 = vld [vmem:[#allocation9 + $0x38] sm:$0xff]
        %v1052 = vld [vmem:[#allocation9 + $0x40] sm:$0xff]
        %v1053 = vld [vmem:[#allocation9 + $0x48] sm:$0xff]
        %v1054 = vld [vmem:[#allocation9 + $0x50] sm:$0xff]
        %v1055 = vld [vmem:[#allocation9 + $0x58] sm:$0xff]
        %v1056 = vld [vmem:[#allocation9 + $0x60] sm:$0xff]
        %v1057 = vld [vmem:[#allocation9 + $0x68] sm:$0xff]
        %v1058 = vld [vmem:[#allocation9 + $0x70] sm:$0xff]
        %v1059 = vld [vmem:[#allocation9 + $0x78] sm:$0xff]
        %v1060 = vld [vmem:[%s11] sm:$0x1]
        %v1062 = vlaneseq
        %v1063 = vshrl.u32 %v1062, 7
        %v1064 = vsub.s32 0, %v1063
        %v1065 = vrot.slane %v1060, %v1064
        %1067 = vmatprep.subr.mxu0 0.0
        %1068 = vmatpush1.msra.mxu0 %v1044
        %1069 = vmatprep.subr.mxu0 0.0
        %1070 = vmatpush1.msra.mxu0 %v1045
        %1071 = vmatprep.subr.mxu0 0.0
        %1072 = vmatpush1.msra.mxu0 %v1046
        %1073 = vmatprep.subr.mxu0 0.0
        %1074 = vmatpush1.msra.mxu0 %v1047
        %1075 = vmatprep.subr.mxu0 0.0
        %1076 = vmatpush1.msra.mxu0 %v1048
        %1077 = vmatprep.subr.mxu0 0.0
        %1078 = vmatpush1.msra.mxu0 %v1049
        %1079 = vmatprep.subr.mxu0 0.0
        %1080 = vmatpush1.msra.mxu0 %v1050
        %1081 = vmatprep.subr.mxu0 0.0
        %1082 = vmatpush1.msra.mxu0 %v1051
        %1083 = vmatprep.subr.mxu0 0.0
        %1084 = vmatpush1.msra.mxu0 %v1052
        %1085 = vmatprep.subr.mxu0 0.0
        %1086 = vmatpush1.msra.mxu0 %v1053
        %1087 = vmatprep.subr.mxu0 0.0
        %1088 = vmatpush1.msra.mxu0 %v1054
        %1089 = vmatprep.subr.mxu0 0.0
        %1090 = vmatpush1.msra.mxu0 %v1055
        %1091 = vmatprep.subr.mxu0 0.0
        %1092 = vmatpush1.msra.mxu0 %v1056
        %1093 = vmatprep.subr.mxu0 0.0
        %1094 = vmatpush1.msra.mxu0 %v1057
        %1095 = vmatprep.subr.mxu0 0.0
        %1096 = vmatpush1.msra.mxu0 %v1058
        %1097 = vmatprep.subr.mxu0 0.0
        %1098 = vmatpush1.msra.mxu0 %v1059
        %1099 = vmatprep.subr.mxu0 0.0
        %1100 = vmatpush1.msra.mxu0 0.0
        %1101 = vmatprep.subr.mxu0 0.0
        %1102 = vmatpush1.msra.mxu0 0.0
        %1103 = vmatprep.subr.mxu0 0.0
        %1104 = vmatpush1.msra.mxu0 0.0
        %1105 = vmatprep.subr.mxu0 0.0
        %1106 = vmatpush1.msra.mxu0 0.0
        %1107 = vmatprep.subr.mxu0 0.0
        %1108 = vmatpush1.msra.mxu0 0.0
        %1109 = vmatprep.subr.mxu0 0.0
        %1110 = vmatpush1.msra.mxu0 0.0
        %1111 = vmatprep.subr.mxu0 0.0
        %1112 = vmatpush1.msra.mxu0 0.0
        %1113 = vmatprep.subr.mxu0 0.0
        %1114 = vmatpush1.msra.mxu0 0.0
        %1115 = vmatprep.subr.mxu0 0.0
        %1116 = vmatpush1.msra.mxu0 0.0
        %1117 = vmatprep.subr.mxu0 0.0
        %1118 = vmatpush1.msra.mxu0 0.0
        %1119 = vmatprep.subr.mxu0 0.0
        %1120 = vmatpush1.msra.mxu0 0.0
        %1121 = vmatprep.subr.mxu0 0.0
        %1122 = vmatpush1.msra.mxu0 0.0
        %1123 = vmatprep.subr.mxu0 0.0
        %1124 = vmatpush1.msra.mxu0 0.0
        %1125 = vmatprep.subr.mxu0 0.0
        %1126 = vmatpush1.msra.mxu0 0.0
        %1127 = vmatprep.subr.mxu0 0.0
        %1128 = vmatpush1.msra.mxu0 0.0
        %1129 = vmatprep.subr.mxu0 0.0
        %1130 = vmatpush1.msra.mxu0 0.0
        %1131 = vmatprep.mubr.f32.mxu0 0.0
        %1132 = vmatmul.mubr.f32.gmra.mrb[0].mxu0 %v1040
        %v1133 = vpop.f32.mrb[0].mxu0
        %v1134 = vadd.f32 %v1065, %v1133
        %v1135 = vpop.f32.mrb[0].mxu0
        %1136 = vmatprep.mubr.f32.mxu0 0.0
        %1137 = vmatmul.mubr.f32.gmra.mrb[0].mxu0 %v1041
        %v1138 = vpop.f32.mrb[0].mxu0
        %v1139 = vadd.f32 %v1065, %v1138
        %v1140 = vpop.f32.mrb[0].mxu0
        %1141 = vmatprep.mubr.f32.mxu0 0.0
        %1142 = vmatmul.mubr.f32.gmra.mrb[0].mxu0 %v1042
        %v1143 = vpop.f32.mrb[0].mxu0
        %v1144 = vadd.f32 %v1065, %v1143
        %v1145 = vpop.f32.mrb[0].mxu0
        %1146 = vmatprep.mubr.f32.mxu0 0.0
        %1147 = vmatmul.mubr.f32.gmra.mrb[0].mxu0 %v1043
        %v1148 = vpop.f32.mrb[0].mxu0
        %v1149 = vadd.f32 %v1065, %v1148
        %v1150 = vpop.f32.mrb[0].mxu0
        %1151 = vdwg.mxu0
        %1152 = vst [vmem:[%s488] sm:$0xff] %v1134
        %1153 = vst [vmem:[%s488 + $0x8] sm:$0xff] %v1139
        %1154 = vst [vmem:[%s488 + $0x10] sm:$0xff] %v1144
        %1155 = vst [vmem:[%s488 + $0x18] sm:$0xff] %v1149
        %v1156 = vld [vmem:[#allocation3] sm:$0xff]
        %v1157 = vld [vmem:[%s500] sm:$0xff]
        %vm1158 = vcmask 261120
        %v1160 = vsel %vm1158, %v1157, 0
        %1162 = vmatprep.subr.mxu0 0.0
        %1163 = vmatpush1.msra.mxu0 %v1134
        %1164 = vmatprep.subr.mxu0 0.0
        %1165 = vmatpush1.msra.mxu0 %v1139
        %1166 = vmatprep.subr.mxu0 0.0
        %1167 = vmatpush1.msra.mxu0 %v1144
        %1168 = vmatprep.subr.mxu0 0.0
        %1169 = vmatpush1.msra.mxu0 %v1149
        %1170 = vmatprep.subr.mxu0 0.0
        %1171 = vmatpush1.msra.mxu0 0.0
        %1172 = vmatprep.subr.mxu0 0.0
        %1173 = vmatpush1.msra.mxu0 0.0
        %1174 = vmatprep.subr.mxu0 0.0
        %1175 = vmatpush1.msra.mxu0 0.0
        %1176 = vmatprep.subr.mxu0 0.0
        %1177 = vmatpush1.msra.mxu0 0.0
        %1178 = vmatprep.subr.mxu0 0.0
        %1179 = vmatpush1.msra.mxu0 0.0
        %1180 = vmatprep.subr.mxu0 0.0
        %1181 = vmatpush1.msra.mxu0 0.0
        %1182 = vmatprep.subr.mxu0 0.0
        %1183 = vmatpush1.msra.mxu0 0.0
        %1184 = vmatprep.subr.mxu0 0.0
        %1185 = vmatpush1.msra.mxu0 0.0
        %1186 = vmatprep.subr.mxu0 0.0
        %1187 = vmatpush1.msra.mxu0 0.0
        %1188 = vmatprep.subr.mxu0 0.0
        %1189 = vmatpush1.msra.mxu0 0.0
        %1190 = vmatprep.subr.mxu0 0.0
        %1191 = vmatpush1.msra.mxu0 0.0
        %1192 = vmatprep.subr.mxu0 0.0
        %1193 = vmatpush1.msra.mxu0 0.0
        %1194 = vmatprep.subr.mxu0 0.0
        %1195 = vmatpush1.msra.mxu0 0.0
        %1196 = vmatprep.subr.mxu0 0.0
        %1197 = vmatpush1.msra.mxu0 0.0
        %1198 = vmatprep.subr.mxu0 0.0
        %1199 = vmatpush1.msra.mxu0 0.0
        %1200 = vmatprep.subr.mxu0 0.0
        %1201 = vmatpush1.msra.mxu0 0.0
        %1202 = vmatprep.subr.mxu0 0.0
        %1203 = vmatpush1.msra.mxu0 0.0
        %1204 = vmatprep.subr.mxu0 0.0
        %1205 = vmatpush1.msra.mxu0 0.0
        %1206 = vmatprep.subr.mxu0 0.0
        %1207 = vmatpush1.msra.mxu0 0.0
        %1208 = vmatprep.subr.mxu0 0.0
        %1209 = vmatpush1.msra.mxu0 0.0
        %1210 = vmatprep.subr.mxu0 0.0
        %1211 = vmatpush1.msra.mxu0 0.0
        %1212 = vmatprep.subr.mxu0 0.0
        %1213 = vmatpush1.msra.mxu0 0.0
        %1214 = vmatprep.subr.mxu0 0.0
        %1215 = vmatpush1.msra.mxu0 0.0
        %1216 = vmatprep.subr.mxu0 0.0
        %1217 = vmatpush1.msra.mxu0 0.0
        %1218 = vmatprep.subr.mxu0 0.0
        %1219 = vmatpush1.msra.mxu0 0.0
        %1220 = vmatprep.subr.mxu0 0.0
        %1221 = vmatpush1.msra.mxu0 0.0
        %1222 = vmatprep.subr.mxu0 0.0
        %1223 = vmatpush1.msra.mxu0 0.0
        %1224 = vmatprep.subr.mxu0 0.0
        %1225 = vmatpush1.msra.mxu0 0.0
        %1226 = vmatprep.mubr.f32.mxu0 0.0
        %1227 = vmatmul.mubr.f32.gmra.mrb[0].mxu0 %v1160
        %v1228 = vpop.f32.mrb[0].mxu0
        %v1229 = vadd.f32 0.0, %v1228
        %v1230 = vpop.f32.mrb[0].mxu0
        %1231 = vdwg.mxu0
        %v1232 = vadd.f32 %v1156, %v1229
        %1233 = vst [vmem:[#allocation3] sm:$0xff] %v1232
        %p1234 = scmp.eq.s32.totalorder %s31, 1
        // Predicated region
        $region85: #{tpu_custom_call.1} parent=67 // pred_check
          %p1235 = pneg %p1234
        $region86: #{tpu_custom_call.1} parent=67 // pred_check_branch
          %1237 = sbr.rel (%p1235) target = $region88
        $region87: #{tpu_custom_call.1} parent=67 // pred_region
          %v1238 = vld [vmem:[#allocation3] sm:$0xff]
          %v1239 = vld [vmem:[%s2] sm:$0xff]
          %v1240 = vmul.f32 %v1239, %v1238
          %1241 = vadd.xlane.f32.xlu0 %v1240
          %v1242 = vpop.xlane.xlu0 %1241
          %v1243 = vld [vmem:[%s3] sm:$0xff]
          %v1244 = vmul.f32 %v1243, %v1238
          %1245 = vadd.xlane.f32.xlu0 %v1244
          %v1246 = vpop.xlane.xlu0 %1245
          %v1247 = vld [vmem:[%s4] sm:$0xff]
          %v1248 = vadd.f32 %v1242, %v1247
          %v1249 = vmul.f32 %v1248, 0.5
          %v1250 = vtanh.pop %v1249
          %v1251 = vadd.f32 %v1250, 1.0
          %v1252 = vmul.f32 %v1251, 0.5
          %v1253 = vmul.f32 %v1247, 0.2
          %v1254 = vmul.f32 %v1246, 0.8
          %v1255 = vadd.f32 %v1253, %v1254
          %v1256 = vlaneseq
          %v1257 = vand.u32 %v1256, 127
          %vm1258 = vcmp.eq.s32.totalorder %v1257, 16
          %vm1259 = vcmp.eq.s32.totalorder %v1257, 17
          %1261 = vset.pattern.permute.xlu0 0
          %1262 = vperm.xlu0 %1261, %v1255
          %v1263 = vpop.permute.xlu0 %1262
          %v1265 = vsel %vm1259, %v1263, %v926
          %1267 = vset.pattern.permute.xlu0 0
          %1268 = vperm.xlu0 %1267, %v1252
          %v1269 = vpop.permute.xlu0 %1268
          %v1271 = vsel %vm1258, %v1269, %v1265
          %1272 = vst [vmem:[#allocation11] sm:$0xff] %v1271
        $region88: #{tpu_custom_call.1} parent=67 // pred_fallthru
          _
        %s1273 = sand.u32 %s301, 1
        %s1274 = scalar_lea.sflag [#allocation6], %s1273
        %s1275 = sand.u32 %s301, 1
        %s1276 = smul.addr %s1275, 32
        %s1277 = scalar_lea.vmem [#allocation10], %s1276
        // Predicated region
        $region89: #{tpu_custom_call.1} parent=67 // pred_check
          %p1278 = pneg %p311
        $region90: #{tpu_custom_call.1} parent=67 // pred_check_branch
          %1280 = sbr.rel (%p1278) target = $region92
        $region91: #{tpu_custom_call.1} parent=67 // pred_region
          %s1281 = smul.u32 4, %s31
          %s1283 = ssub.s32 512, 512
          %1284 = vsyncadd %s1274, %s1283
          %s1285 = smul.addr %s1281, 128
          %s1286 = scalar_lea.hbm %s12, %s1285
          %s1287 = sshll.u32 %s1277, 4
          %s1288 = int_to_ptr.vmem [resolvable:$true] %s1287
          %1293 = dma.vmem_to_hbm [thread:$0]  %s1288, 512, %s1286, %s1274, 128, 128, 8
        $region92: #{tpu_custom_call.1} parent=67 // pred_fallthru
          _
        // Predicated region
        $region93: #{tpu_custom_call.1} parent=67 // pred_check
          %p1294 = pneg %p332
        $region94: #{tpu_custom_call.1} parent=67 // pred_check_branch
          %1296 = sbr.rel (%p1294) target = $region96
        $region95: #{tpu_custom_call.1} parent=67 // pred_region
          %s1298 = ssub.s32 128, 128
          %1299 = vsyncadd [#allocation12], %s1298
          %s1301 = sshll.u32 [#allocation11], 4
          %s1302 = int_to_ptr.vmem [resolvable:$true] %s1301
          %1304 = dma.vmem_to_hbm [thread:$0]  %s1302, 128, %s13, [#allocation12]
        $region96: #{tpu_custom_call.1} parent=67 // pred_fallthru
          _
        // Predicated region
        $region97: #{tpu_custom_call.1} parent=67 // pred_check
          %p1305 = pneg %p332
        $region98: #{tpu_custom_call.1} parent=67 // pred_check_branch
          %1307 = sbr.rel (%p1305) target = $region100
        $region99: #{tpu_custom_call.1} parent=67 // pred_region
          %1308 = dma.done [#allocation12], 128
        $region100: #{tpu_custom_call.1} parent=67 // pred_fallthru
          _
      $region68: #{tpu_custom_call.1} parent=5 // pred_fallthru
        _
      %p1309 = scmp.le.s32.totalorder 2, %s26
      // Predicated region
      $region101: #{tpu_custom_call.1} parent=5 // pred_check
        %p1310 = pneg %p1309
      $region102: #{tpu_custom_call.1} parent=5 // pred_check_branch
        %1312 = sbr.rel (%p1310) target = $region104
      $region103: #{tpu_custom_call.1} parent=5 // pred_region
        %s1313 = ssub.s32 %s26, 2
        // Predicated region
        $region105: #{tpu_custom_call.1} parent=103 // pred_check
          %p1314 = pneg %p317
        $region106: #{tpu_custom_call.1} parent=103 // pred_check_branch
          %1316 = sbr.rel (%p1314) target = $region108
        $region107: #{tpu_custom_call.1} parent=103 // pred_region
          %s1317 = sand.u32 %s302, 1
          %s1318 = scalar_lea.sflag [#allocation6], %s1317
          %s1319 = sand.u32 %s302, 1
          %s1320 = smul.addr %s1319, 32
          %s1321 = scalar_lea.vmem [#allocation10], %s1320
          %1322 = dma.done %s1318, 512
        $region108: #{tpu_custom_call.1} parent=103 // pred_fallthru
          _
      $region104: #{tpu_custom_call.1} parent=5 // pred_fallthru
        _
    $region6: #{tpu_custom_call.1} parent=1 // loop_footer
      %s30 = sadd.s32 1, %s26
    $region7: #{tpu_custom_call.1} parent=1 // loop_footer_branch
      %25 = sbr.rel target = $region3
    $region8: #{tpu_custom_call.1} parent=1 // loop_exit
      _
    %1323 = vsyncpa [#allocation5], 1
    %s1324 = scalar_lea.sflag [#allocation5], 1
    %1325 = vsyncpa %s1324, 1
    %1326 = vsyncpa [#allocation8], 1
    %1327 = vsyncpa [#allocation6], 1
    %s1328 = scalar_lea.sflag [#allocation6], 1
    %1329 = vsyncpa %s1328, 1
    %1330 = vsyncpa [#allocation12], 1

</llo_original>
